<compile_context>
chip_gen: v7x
topology: tpu7x:2x2x1
jax: 0.10.0
libtpu: 0.0.40
codegen_flags: <defaults>
</compile_context>

<pallas_src>
import functools

import jax
import jax.numpy as jnp
import numpy as np
from jax.experimental import pallas as pl
from jax.experimental.pallas import tpu as pltpu


def _round_up(v, m):
    return (v + m - 1) // m * m


def _gsa_kernel(x_ref, w1_ref, b1_ref, w2_ref, b2_ref, out_ref, *,
                graphs_per_block, tile_n, tiles_per_graph, rows_per_graph):
    """Fused pointwise-MLP + per-graph max pooling for one grid step.

    x_ref  : (G*tile_n, C+3) bf16   [x | pos] rows of this block
    w1_ref : (C+3, Hp)       bf16
    b1_ref : (1, Hp)         f32
    w2_ref : (Hp, Op)        bf16
    b2_ref : (1, Op)         f32
    out_ref: (1, G, Op)      f32    resident accumulator for this graph block
    """
    t = pl.program_id(1)
    f32 = jnp.float32
    G = graphs_per_block

    # Layer 1: one bf16 K=(C+3) dot with f32 accumulation (replaces the two
    # split x/pos dots + add of the previous version).
    h = jnp.dot(x_ref[...], w1_ref[...], preferred_element_type=f32)
    # Elementwise stays f32 (v5e VPU has no bf16); on v6e/v7x the MXU shadow
    # already covers this VPU work.
    h = jnp.maximum(h + b1_ref[...], 0.0)

    # Layer 2: the hot (K = Hp, 128-padded) matmul in bf16, f32 accumulation.
    y = jnp.dot(h.astype(jnp.bfloat16), w2_ref[...], preferred_element_type=f32)
    y = jnp.maximum(y + b2_ref[...], 0.0)                 # (G*tile_n, Op) f32

    last_t = tiles_per_graph - 1
    valid_last = rows_per_graph - last_t * tile_n          # static, in (0, tile_n]
    pad_exists = valid_last < tile_n                       # static python bool

    def block_max(masked):
        # Per-graph max over this block's rows -> (1, G, Op).
        if masked:
            row = jax.lax.broadcasted_iota(jnp.int32, (tile_n, 1), 0)
            keep = row < valid_last
        segs = []
        for g in range(G):                                 # static, G <= 16
            seg = y[g * tile_n:(g + 1) * tile_n, :]
            if masked:
                # -inf fill: stays correct even if the MLP's last op were not
                # a ReLU (0-fill would not be).
                seg = jnp.where(keep, seg, -jnp.inf)
            segs.append(jnp.max(seg, axis=0, keepdims=True))
        m = segs[0] if G == 1 else jnp.concatenate(segs, axis=0)
        return m[None]                                     # (1, G, Op)

    if tiles_per_graph == 1:
        # Packed-graphs path: single tile per graph, direct store, no init.
        out_ref[...] = block_max(pad_exists)
    else:
        # Multi-tile reduction over the "arbitrary" axis: first tile writes
        # (no zero-init + redundant max), later tiles max-accumulate; only the
        # last tile pays for pad-row masking.
        @pl.when(t == 0)
        def _():
            out_ref[...] = block_max(False)

        if pad_exists:
            @pl.when(jnp.logical_and(t > 0, t != last_t))
            def _():
                out_ref[...] = jnp.maximum(out_ref[...], block_max(False))

            @pl.when(t == last_t)
            def _():
                out_ref[...] = jnp.maximum(out_ref[...], block_max(True))
        else:
            @pl.when(t > 0)
            def _():
                out_ref[...] = jnp.maximum(out_ref[...], block_max(False))


def global_sa_forward(x, pos, batch, params, num_graphs, *, tile_rows=4096):
    """JAX wrapper reproducing GlobalSAModule.forward (eval-mode MLP)."""
    del batch  # sorted, contiguous, equal-sized segments assumed (jnp.repeat layout)
    # TODO(synk): generalise to ragged / unsorted `batch` (per-graph offsets via
    # pltpu.PrefetchScalarGridSpec scalar prefetch).
    w1, b1, w2, b2 = params
    n, c = x.shape
    c3 = c + pos.shape[1]
    h_dim = w1.shape[1]
    out_dim = w2.shape[1]
    assert n % num_graphs == 0, "kernel assumes equal points per graph"
    s = n // num_graphs

    ALIGN = 16                                   # bf16 sublane packing
    tile_rows = max(ALIGN, _round_up(tile_rows, ALIGN))
    s_align = _round_up(s, ALIGN)

    if s_align >= tile_rows or num_graphs == 1:
        # Large graphs: tile rows within a graph, one graph per block.
        graphs_per_block = 1
        tile_n = min(tile_rows, s_align)
        s_pad = _round_up(s, tile_n)
        tiles_per_graph = s_pad // tile_n
        # TODO(synk): when num_graphs == 1 on v7x, split row tiles over the
        # parallel axis (cheap host-side max combine) so both TCs are busy.
    else:
        # Small graphs: pack several whole graphs into one grid step to
        # amortise per-step overhead and widen the output store.
        s_pad = s_align
        tile_n = s_pad
        tiles_per_graph = 1
        g_max = min(tile_rows // s_pad, 16, num_graphs)
        if num_graphs >= 2:                      # keep >= 2 parallel blocks (v7x)
            g_max = max(1, min(g_max, num_graphs // 2))
        graphs_per_block = 1
        for cand in range(g_max, 0, -1):
            if num_graphs % cand == 0:
                graphs_per_block = cand
                break
    num_graph_blocks = num_graphs // graphs_per_block

    h_pad = _round_up(h_dim, 128)
    out_pad = _round_up(out_dim, 128)

    # 128-lane-padded bf16 weights; padded hidden cols give relu(0)=0 and hit
    # zero rows of w2, padded output cols are sliced off afterwards.
    w1p = jnp.pad(w1, ((0, 0), (0, h_pad - h_dim))).astype(jnp.bfloat16)
    b1p = jnp.pad(b1, (0, h_pad - h_dim)).astype(jnp.float32).reshape(1, h_pad)
    w2p = jnp.pad(w2, ((0, h_pad - h_dim), (0, out_pad - out_dim))).astype(jnp.bfloat16)
    b2p = jnp.pad(b2, (0, out_pad - out_dim)).astype(jnp.float32).reshape(1, out_pad)

    # Host-side cat([x, pos]) + bf16 cast in one fused pass; row padding is
    # only materialised when the segment length is not already tile-aligned.
    xcat = jnp.concatenate([x, pos], axis=1).astype(jnp.bfloat16)
    if s_pad != s:
        xcat = xcat.reshape(num_graphs, s, c3)
        xcat = jnp.pad(xcat, ((0, 0), (0, s_pad - s), (0, 0)))
        xcat = xcat.reshape(num_graphs * s_pad, c3)

    kernel = functools.partial(
        _gsa_kernel, graphs_per_block=graphs_per_block, tile_n=tile_n,
        tiles_per_graph=tiles_per_graph, rows_per_graph=s)

    out3 = pl.pallas_call(
        kernel,
        out_shape=jax.ShapeDtypeStruct(
            (num_graph_blocks, graphs_per_block, out_pad), jnp.float32),
        grid=(num_graph_blocks, tiles_per_graph),
        in_specs=[
            pl.BlockSpec((graphs_per_block * tile_n, c3),
                         lambda gb, t: (gb * tiles_per_graph + t, 0)),
            pl.BlockSpec((c3, h_pad), lambda gb, t: (0, 0)),
            pl.BlockSpec((1, h_pad), lambda gb, t: (0, 0)),
            pl.BlockSpec((h_pad, out_pad), lambda gb, t: (0, 0)),
            pl.BlockSpec((1, out_pad), lambda gb, t: (0, 0)),
        ],
        out_specs=pl.BlockSpec((1, graphs_per_block, out_pad),
                               lambda gb, t: (gb, 0, 0)),
        compiler_params=pltpu.CompilerParams(
            dimension_semantics=("parallel", "arbitrary"),
            vmem_limit_bytes=32 * 1024 * 1024,
        ),
    )(xcat, w1p, b1p, w2p, b2p)

    pooled = out3.reshape(num_graphs, out_pad)[:, :out_dim]
    pos_out = jnp.zeros((num_graphs, 3), dtype=pos.dtype)
    batch_out = jnp.arange(num_graphs, dtype=jnp.int32)
    return pooled, pos_out, batch_out


def _reference(x, pos, batch, params, num_graphs):
    """Pure-JAX reference (same bf16 operand rounding, f32 accumulation)."""
    w1, b1, w2, b2 = params
    xpos = jnp.concatenate([x, pos], axis=1).astype(jnp.bfloat16)
    h = jnp.dot(xpos, w1.astype(jnp.bfloat16), preferred_element_type=jnp.float32)
    h = jnp.maximum(h + b1, 0.0)
    y = jnp.dot(h.astype(jnp.bfloat16), w2.astype(jnp.bfloat16),
                preferred_element_type=jnp.float32)
    y = jnp.maximum(y + b2, 0.0)
    neg = jnp.finfo(jnp.float32).min
    outs = []
    for b in range(num_graphs):
        mask = (batch == b)[:, None]
        outs.append(jnp.max(jnp.where(mask, y, neg), axis=0))
    return jnp.stack(outs, axis=0)


def _init_linear(key, fan_in, fan_out):
    """Deterministic PyTorch-style Linear init: U(-1/sqrt(fan_in), +)."""
    kw, kb = jax.random.split(key)
    bound = 1.0 / np.sqrt(fan_in)
    w = jax.random.uniform(kw, (fan_in, fan_out), jnp.float32, -bound, bound)
    b = jax.random.uniform(kb, (fan_out,), jnp.float32, -bound, bound)
    return w, b


if __name__ == "__main__":
    key = jax.random.PRNGKey(0)
    k_l1, k_l2, k_data = jax.random.split(key, 3)

    C, HID, OUT = 5, 32, 64
    w1, b1 = _init_linear(k_l1, C + 3, HID)
    w2, b2 = _init_linear(k_l2, HID, OUT)
    params = (w1, b1, w2, b2)

    # (points_per_graph, num_graphs, tile_rows) covering:
    #   * packed multi-graph blocks with pad-row masking (s=200, B=4),
    #   * multi-tile per-graph reduction with a masked last tile (s=3000),
    #   * multi-tile reduction with no padding at all (s=256, tile 128).
    cases = [(200, 4, 4096), (3000, 2, 1024), (256, 2, 128)]

    for s, B, tile_rows in cases:
        kx, kp, k_data = jax.random.split(k_data, 3)
        N = s * B
        x = jax.random.normal(kx, (N, C), dtype=jnp.float32)
        pos = jax.random.normal(kp, (N, 3), dtype=jnp.float32)
        batch = jnp.repeat(jnp.arange(B, dtype=jnp.int32), s)

        out_x, out_pos, out_batch = global_sa_forward(
            x, pos, batch, params, B, tile_rows=tile_rows)
        jax.block_until_ready((out_x, out_pos, out_batch))

        ref = _reference(x, pos, batch, params, B)
        np.testing.assert_allclose(np.asarray(out_x), np.asarray(ref),
                                   rtol=1e-2, atol=1e-2)
        assert out_x.shape == (B, OUT)
        assert out_pos.shape == (B, 3) and bool(jnp.all(out_pos == 0))
        assert out_batch.shape == (B,) and bool(jnp.all(out_batch == jnp.arange(B)))

    print("KERNEL_OK")
</pallas_src>

<mosaic_0001>
module attributes {stable_mosaic.version = 11 : i64} {
  func.func @_gsa_kernel(%arg0: i32, %arg1: i32, %arg2: memref<416x8xbf16, #tpu.memory_space<vmem>>, %arg3: memref<8x128xbf16, #tpu.memory_space<vmem>>, %arg4: memref<1x128xf32, #tpu.memory_space<vmem>>, %arg5: memref<128x128xbf16, #tpu.memory_space<vmem>>, %arg6: memref<1x128xf32, #tpu.memory_space<vmem>>, %arg7: memref<1x2x128xf32, #tpu.memory_space<vmem>>) attributes {dimension_semantics = [#tpu.dimension_semantics<parallel>, #tpu.dimension_semantics<arbitrary>], iteration_bounds = array<i64: 2, 1>, scalar_prefetch = 0 : i64, scratch_operands = 0 : i64, tpu.core_type = #tpu.core_type<tc>, window_params = [{transform_indices = @transform_0, window_bounds = array<i64: 416, 8>}, {pipeline_mode = #tpu.pipeline_mode<synchronous>, transform_indices = @transform_1, window_bounds = array<i64: 8, 128>}, {pipeline_mode = #tpu.pipeline_mode<synchronous>, transform_indices = @transform_2, window_bounds = array<i64: 1, 128>}, {pipeline_mode = #tpu.pipeline_mode<synchronous>, transform_indices = @transform_3, window_bounds = array<i64: 128, 128>}, {pipeline_mode = #tpu.pipeline_mode<synchronous>, transform_indices = @transform_4, window_bounds = array<i64: 1, 128>}, {transform_indices = @transform_5, window_bounds = array<i64: 1, 2, 128>}]} {
    %c0 = arith.constant 0 : index
    %c0_0 = arith.constant 0 : index
    %0 = vector.load %arg2[%c0, %c0_0] : memref<416x8xbf16, #tpu.memory_space<vmem>>, vector<416x8xbf16>
    %c0_1 = arith.constant 0 : index
    %c0_2 = arith.constant 0 : index
    %1 = vector.load %arg3[%c0_1, %c0_2] : memref<8x128xbf16, #tpu.memory_space<vmem>>, vector<8x128xbf16>
    %cst = arith.constant dense<0.000000e+00> : vector<416x128xf32>
    %2 = tpu.matmul %0, %1, %cst {dimension_numbers = #tpu.dot_dimension_numbers<[1], [0], [0], [1], [0, 0, 1, 1], [], []>} : vector<416x8xbf16>, vector<8x128xbf16>, vector<416x128xf32> -> vector<416x128xf32>
    %c0_3 = arith.constant 0 : index
    %c0_4 = arith.constant 0 : index
    %3 = vector.load %arg4[%c0_3, %c0_4] : memref<1x128xf32, #tpu.memory_space<vmem>>, vector<1x128xf32>
    %4 = vector.broadcast %3 : vector<1x128xf32> to vector<416x128xf32>
    %5 = arith.addf %2, %4 : vector<416x128xf32>
    %cst_5 = arith.constant 0.000000e+00 : f32
    %6 = vector.broadcast %cst_5 : f32 to vector<416x128xf32>
    %7 = arith.maximumf %5, %6 : vector<416x128xf32>
    %8 = arith.truncf %7 : vector<416x128xf32> to vector<416x128xbf16>
    %c0_6 = arith.constant 0 : index
    %c0_7 = arith.constant 0 : index
    %9 = vector.load %arg5[%c0_6, %c0_7] : memref<128x128xbf16, #tpu.memory_space<vmem>>, vector<128x128xbf16>
    %cst_8 = arith.constant dense<0.000000e+00> : vector<416x128xf32>
    %10 = tpu.matmul %8, %9, %cst_8 {dimension_numbers = #tpu.dot_dimension_numbers<[1], [0], [0], [1], [0, 0, 1, 1], [], []>} : vector<416x128xbf16>, vector<128x128xbf16>, vector<416x128xf32> -> vector<416x128xf32>
    %c0_9 = arith.constant 0 : index
    %c0_10 = arith.constant 0 : index
    %11 = vector.load %arg6[%c0_9, %c0_10] : memref<1x128xf32, #tpu.memory_space<vmem>>, vector<1x128xf32>
    %12 = vector.broadcast %11 : vector<1x128xf32> to vector<416x128xf32>
    %13 = arith.addf %10, %12 : vector<416x128xf32>
    %cst_11 = arith.constant 0.000000e+00 : f32
    %14 = vector.broadcast %cst_11 : f32 to vector<416x128xf32>
    %15 = arith.maximumf %13, %14 : vector<416x128xf32>
    %16 = tpu.iota {dimensions = array<i32: 0>} : vector<208x1xi32>
    %c200_i32 = arith.constant 200 : i32
    %17 = vector.broadcast %c200_i32 : i32 to vector<208x1xi32>
    %18 = arith.cmpi slt, %16, %17 : vector<208x1xi32>
    %19 = vector.extract_strided_slice %15 {offsets = [0, 0], sizes = [208, 128], strides = [1, 1]} : vector<416x128xf32> to vector<208x128xf32>
    %cst_12 = arith.constant 0xFF800000 : f32
    %20 = vector.shape_cast %18 : vector<208x1xi1> to vector<208x1xi1>
    %21 = vector.broadcast %20 : vector<208x1xi1> to vector<208x128xi1>
    %22 = vector.broadcast %cst_12 : f32 to vector<208x128xf32>
    %23 = arith.select %21, %19, %22 : vector<208x128xi1>, vector<208x128xf32>
    %cst_13 = arith.constant dense<0xFF800000> : vector<128xf32>
    %24 = vector.multi_reduction <maximumf>, %23, %cst_13 [0] : vector<208x128xf32> to vector<128xf32>
    %25 = vector.shape_cast %24 : vector<128xf32> to vector<1x128xf32>
    %26 = vector.extract_strided_slice %15 {offsets = [208, 0], sizes = [208, 128], strides = [1, 1]} : vector<416x128xf32> to vector<208x128xf32>
    %cst_14 = arith.constant 0xFF800000 : f32
    %27 = vector.shape_cast %18 : vector<208x1xi1> to vector<208x1xi1>
    %28 = vector.broadcast %27 : vector<208x1xi1> to vector<208x128xi1>
    %29 = vector.broadcast %cst_14 : f32 to vector<208x128xf32>
    %30 = arith.select %28, %26, %29 : vector<208x128xi1>, vector<208x128xf32>
    %cst_15 = arith.constant dense<0xFF800000> : vector<128xf32>
    %31 = vector.multi_reduction <maximumf>, %30, %cst_15 [0] : vector<208x128xf32> to vector<128xf32>
    %32 = vector.shape_cast %31 : vector<128xf32> to vector<1x128xf32>
    %33 = tpu.concatenate %25, %32 in 0 : vector<1x128xf32>, vector<1x128xf32> -> vector<2x128xf32>
    %34 = vector.shape_cast %33 : vector<2x128xf32> to vector<1x2x128xf32>
    %c0_16 = arith.constant 0 : index
    %c0_17 = arith.constant 0 : index
    %c0_18 = arith.constant 0 : index
    %35 = vector.load %arg7[%c0_16, %c0_17, %c0_18] : memref<1x2x128xf32, #tpu.memory_space<vmem>>, vector<1x2x128xf32>
    tpu.vector_store %arg7[%c0_16, %c0_17, %c0_18], %34 {strides = array<i32>} : memref<1x2x128xf32, #tpu.memory_space<vmem>>, vector<1x2x128xf32>,
    return
  }
  func.func @transform_0(%arg0: i32, %arg1: i32) -> (i32, i32) {
    %c1_i32 = arith.constant 1 : i32
    %0 = arith.muli %arg0, %c1_i32 : i32
    %1 = arith.addi %0, %arg1 : i32
    %c0_i32 = arith.constant 0 : i32
    %c0_i32_0 = arith.constant 0 : i32
    return %1, %c0_i32 : i32, i32
  }
  func.func @transform_1(%arg0: i32, %arg1: i32) -> (i32, i32) {
    %c0_i32 = arith.constant 0 : i32
    %c0_i32_0 = arith.constant 0 : i32
    %c0_i32_1 = arith.constant 0 : i32
    return %c0_i32, %c0_i32_0 : i32, i32
  }
  func.func @transform_2(%arg0: i32, %arg1: i32) -> (i32, i32) {
    %c0_i32 = arith.constant 0 : i32
    %c0_i32_0 = arith.constant 0 : i32
    %c0_i32_1 = arith.constant 0 : i32
    return %c0_i32, %c0_i32_0 : i32, i32
  }
  func.func @transform_3(%arg0: i32, %arg1: i32) -> (i32, i32) {
    %c0_i32 = arith.constant 0 : i32
    %c0_i32_0 = arith.constant 0 : i32
    %c0_i32_1 = arith.constant 0 : i32
    return %c0_i32, %c0_i32_0 : i32, i32
  }
  func.func @transform_4(%arg0: i32, %arg1: i32) -> (i32, i32) {
    %c0_i32 = arith.constant 0 : i32
    %c0_i32_0 = arith.constant 0 : i32
    %c0_i32_1 = arith.constant 0 : i32
    return %c0_i32, %c0_i32_0 : i32, i32
  }
  func.func @transform_5(%arg0: i32, %arg1: i32) -> (i32, i32, i32) {
    %c0_i32 = arith.constant 0 : i32
    %c0_i32_0 = arith.constant 0 : i32
    %c0_i32_1 = arith.constant 0 : i32
    return %arg0, %c0_i32, %c0_i32_0 : i32, i32, i32
  }
}

</mosaic_0001>

<llo_original>
// kernel: tpu_custom_call.1
$region0: #{tpu_custom_call.1}
  #allocation0 [shape = 'u32[]', space=smem, size = 0x4, offset = 0x4, fixed_abs, tag = 'smem constant byte address 0x4 - core index']
  #allocation1 [shape = 'u32[144,128]{1,0:T(1,128)}', space=vmem, size = 0x12000, scoped, tag = 'internal scratch']
  %s0 = inlined_call_operand.vmem [shape: bf16[832,8], index: 0, kind: input, shape index: {}]
  %s1 = inlined_call_operand.vmem [shape: bf16[8,128], index: 1, kind: input, shape index: {}]
  %s2 = inlined_call_operand.vmem [shape: f32[1,128], index: 2, kind: input, shape index: {}]
  %s3 = inlined_call_operand.vmem [shape: bf16[128,128], index: 3, kind: input, shape index: {}]
  %s4 = inlined_call_operand.vmem [shape: f32[1,128], index: 4, kind: input, shape index: {}]
  %s5 = inlined_call_operand.hbm [shape: f32[2,2,128], index: 5, kind: output, shape index: {}]
  %s6 = sld [smem:[#allocation0]]
  $region53: #{tpu_custom_call.1} parent=0
    _
  %s8 = ssub.s32 1, %s6
  %s9 = scalar_select 0, %s8, %s6
  $region1: #{tpu_custom_call.1} parent=0
    #allocation2 [shape = 'u8[2048]{0}', space=vmem, size = 0x800, scoped, tag = 'output window, operand 0']
    #allocation3 [shape = 's32[2]{0}', space=sflag, size = 0x8, scoped, tag = 'scoped memory for tpu_custom_call.1']
    %10 = vsyncpa [#allocation3], 0
    %s11 = scalar_lea.sflag [#allocation3], 1
    %12 = vsyncpa %s11, 0
    loop: start=0, step=1, limit=4
    $region2: #{tpu_custom_call.1} parent=1 // loop_pre_header
      _
    $region3: #{tpu_custom_call.1} parent=1 // loop_header
      %s14 = sphi 0, %s18
      %p15 = scmp.ge.s32.totalorder %s14, 4
      %s21 = sphi 0, %s33
      %s22 = sphi 0, %s29
      %s23 = sphi 0, %s21
      %s24 = sphi 0, %s22
      %s25 = sphi 0, %s23
      %s26 = sphi 0, %s24
      %s38 = sphi 0, %s40
      %s41 = sphi 0, %s38
      %s42 = sphi 0, %s41
      %s58 = sphi 0, %s42
      %s62 = sphi 0, %s62
      %s64 = sphi 0, %s62
      %s65 = sphi 0, %s64
      %s79 = sphi 0, %s65
      %s83 = sphi 0, %s83
      %s85 = sphi 0, %s83
      %s86 = sphi 0, %s85
      %s100 = sphi 0, %s86
      %s104 = sphi 0, %s104
      %s106 = sphi 0, %s104
      %s107 = sphi 0, %s106
      %s121 = sphi 0, %s107
      %s125 = sphi 0, %s125
      %s127 = sphi 0, %s125
      %s128 = sphi 0, %s127
      %s142 = sphi 0, %s128
      %s148 = sphi 0, %s150
      %s151 = sphi 0, %s148
      %s152 = sphi 0, %s151
      %s168 = sphi 0, %s152
    $region4: #{tpu_custom_call.1} parent=1 // loop_header_branch
      %17 = sbr.rel (%p15) target = $region8
    $region5: #{tpu_custom_call.1} parent=1 // loop_body
      %s19 = ssub.s32 %s14, 1
      %s20 = ssub.s32 %s14, 2
      %s27 = sadd.s32 1, %s22
      %p28 = scmp.ge.s32.totalorder %s27, 1
      %s29 = scalar_select %p28, 0, %s27
      %s30 = sadd.s32 1, %s21
      %s31 = scalar_select %p28, %s30, %s21
      %p32 = scmp.ge.s32.totalorder %s31, 2
      %s33 = scalar_select %p32, 0, %s31
      %s34 = sadd.s32 %s21, %s22
      %s35 = sadd.s32 %s33, %s29
      %s36 = ssub.s32 %s34, %s35
      %p37 = scmp.eq.s32.totalorder %s36, 0
      %s39 = sadd.s32 %s38, 1
      %s40 = scalar_select %p37, %s38, %s39
      %p43 = pneg %p37
      %p44 = scmp.eq.s32.totalorder %s14, 1
      %p45 = por %p43, %p44
      %p46 = scmp.ne.s32.totalorder %s38, %s41
      %p47 = scmp.eq.s32.totalorder %s14, 0
      %p48 = por %p46, %p47
      %p49 = scmp.ne.s32.totalorder %s38, %s41
      %p50 = scmp.eq.s32.totalorder %s19, 1
      %p51 = por %p49, %p50
      %p52 = scmp.ne.s32.totalorder %s41, %s42
      %p53 = scmp.eq.s32.totalorder %s19, 0
      %p54 = por %p52, %p53
      %p55 = scmp.ne.s32.totalorder %s41, %s42
      %p56 = scmp.eq.s32.totalorder %s20, 1
      %p57 = por %p55, %p56
      %p59 = scmp.ne.s32.totalorder %s42, %s58
      %p60 = scmp.eq.s32.totalorder %s20, 0
      %p61 = por %p59, %p60
      %s63 = sadd.s32 %s62, 1
      %p66 = scmp.eq.s32.totalorder %s14, 1
      %p67 = scmp.ne.s32.totalorder %s62, %s64
      %p68 = scmp.eq.s32.totalorder %s14, 0
      %p69 = por %p67, %p68
      %p70 = scmp.ne.s32.totalorder %s62, %s64
      %p71 = scmp.eq.s32.totalorder %s19, 1
      %p72 = por %p70, %p71
      %p73 = scmp.ne.s32.totalorder %s64, %s65
      %p74 = scmp.eq.s32.totalorder %s19, 0
      %p75 = por %p73, %p74
      %p76 = scmp.ne.s32.totalorder %s64, %s65
      %p77 = scmp.eq.s32.totalorder %s20, 1
      %p78 = por %p76, %p77
      %p80 = scmp.ne.s32.totalorder %s65, %s79
      %p81 = scmp.eq.s32.totalorder %s20, 0
      %p82 = por %p80, %p81
      %s84 = sadd.s32 %s83, 1
      %p87 = scmp.eq.s32.totalorder %s14, 1
      %p88 = scmp.ne.s32.totalorder %s83, %s85
      %p89 = scmp.eq.s32.totalorder %s14, 0
      %p90 = por %p88, %p89
      %p91 = scmp.ne.s32.totalorder %s83, %s85
      %p92 = scmp.eq.s32.totalorder %s19, 1
      %p93 = por %p91, %p92
      %p94 = scmp.ne.s32.totalorder %s85, %s86
      %p95 = scmp.eq.s32.totalorder %s19, 0
      %p96 = por %p94, %p95
      %p97 = scmp.ne.s32.totalorder %s85, %s86
      %p98 = scmp.eq.s32.totalorder %s20, 1
      %p99 = por %p97, %p98
      %p101 = scmp.ne.s32.totalorder %s86, %s100
      %p102 = scmp.eq.s32.totalorder %s20, 0
      %p103 = por %p101, %p102
      %s105 = sadd.s32 %s104, 1
      %p108 = scmp.eq.s32.totalorder %s14, 1
      %p109 = scmp.ne.s32.totalorder %s104, %s106
      %p110 = scmp.eq.s32.totalorder %s14, 0
      %p111 = por %p109, %p110
      %p112 = scmp.ne.s32.totalorder %s104, %s106
      %p113 = scmp.eq.s32.totalorder %s19, 1
      %p114 = por %p112, %p113
      %p115 = scmp.ne.s32.totalorder %s106, %s107
      %p116 = scmp.eq.s32.totalorder %s19, 0
      %p117 = por %p115, %p116
      %p118 = scmp.ne.s32.totalorder %s106, %s107
      %p119 = scmp.eq.s32.totalorder %s20, 1
      %p120 = por %p118, %p119
      %p122 = scmp.ne.s32.totalorder %s107, %s121
      %p123 = scmp.eq.s32.totalorder %s20, 0
      %p124 = por %p122, %p123
      %s126 = sadd.s32 %s125, 1
      %p129 = scmp.eq.s32.totalorder %s14, 1
      %p130 = scmp.ne.s32.totalorder %s125, %s127
      %p131 = scmp.eq.s32.totalorder %s14, 0
      %p132 = por %p130, %p131
      %p133 = scmp.ne.s32.totalorder %s125, %s127
      %p134 = scmp.eq.s32.totalorder %s19, 1
      %p135 = por %p133, %p134
      %p136 = scmp.ne.s32.totalorder %s127, %s128
      %p137 = scmp.eq.s32.totalorder %s19, 0
      %p138 = por %p136, %p137
      %p139 = scmp.ne.s32.totalorder %s127, %s128
      %p140 = scmp.eq.s32.totalorder %s20, 1
      %p141 = por %p139, %p140
      %p143 = scmp.ne.s32.totalorder %s128, %s142
      %p144 = scmp.eq.s32.totalorder %s20, 0
      %p145 = por %p143, %p144
      %s146 = ssub.s32 %s21, %s33
      %p147 = scmp.eq.s32.totalorder %s146, 0
      %s149 = sadd.s32 %s148, 1
      %s150 = scalar_select %p147, %s148, %s149
      %p153 = pneg %p147
      %p154 = scmp.eq.s32.totalorder %s14, 1
      %p155 = por %p153, %p154
      %p156 = scmp.ne.s32.totalorder %s148, %s151
      %p157 = scmp.eq.s32.totalorder %s14, 0
      %p158 = por %p156, %p157
      %p159 = scmp.ne.s32.totalorder %s148, %s151
      %p160 = scmp.eq.s32.totalorder %s19, 1
      %p161 = por %p159, %p160
      %p162 = scmp.ne.s32.totalorder %s151, %s152
      %p163 = scmp.eq.s32.totalorder %s19, 0
      %p164 = por %p162, %p163
      %p165 = scmp.ne.s32.totalorder %s151, %s152
      %p166 = scmp.eq.s32.totalorder %s20, 1
      %p167 = por %p165, %p166
      %p169 = scmp.ne.s32.totalorder %s152, %s168
      %p170 = scmp.eq.s32.totalorder %s20, 0
      %p171 = por %p169, %p170
      %p172 = scmp.le.s32.totalorder 1, %s14
      %p173 = scmp.lt.s32.totalorder %s14, 3
      %p174 = pnand %p172, %p173
      %p175 = pneg %p174
      // Predicated region
      $region9: #{tpu_custom_call.1} parent=5 // pred_check
        _
      $region10: #{tpu_custom_call.1} parent=5 // pred_check_branch
        %177 = sbr.rel (%p174) target = $region12
      $region11: #{tpu_custom_call.1} parent=5 // pred_region
        %s178 = ssub.s32 %s14, 1
        // Predicated region
        $region13: #{tpu_custom_call.1} parent=11 // pred_check
          %p179 = pneg %p75
        $region14: #{tpu_custom_call.1} parent=11 // pred_check_branch
          %181 = sbr.rel (%p179) target = $region16
        $region15: #{tpu_custom_call.1} parent=11 // pred_region
          _
        $region16: #{tpu_custom_call.1} parent=11 // pred_fallthru
          _
        // Predicated region
        $region17: #{tpu_custom_call.1} parent=11 // pred_check
          %p182 = pneg %p96
        $region18: #{tpu_custom_call.1} parent=11 // pred_check_branch
          %184 = sbr.rel (%p182) target = $region20
        $region19: #{tpu_custom_call.1} parent=11 // pred_region
          _
        $region20: #{tpu_custom_call.1} parent=11 // pred_fallthru
          _
        // Predicated region
        $region21: #{tpu_custom_call.1} parent=11 // pred_check
          %p185 = pneg %p117
        $region22: #{tpu_custom_call.1} parent=11 // pred_check_branch
          %187 = sbr.rel (%p185) target = $region24
        $region23: #{tpu_custom_call.1} parent=11 // pred_region
          _
        $region24: #{tpu_custom_call.1} parent=11 // pred_fallthru
          _
        // Predicated region
        $region25: #{tpu_custom_call.1} parent=11 // pred_check
          %p188 = pneg %p138
        $region26: #{tpu_custom_call.1} parent=11 // pred_check_branch
          %190 = sbr.rel (%p188) target = $region28
        $region27: #{tpu_custom_call.1} parent=11 // pred_region
          _
        $region28: #{tpu_custom_call.1} parent=11 // pred_fallthru
          _
      $region12: #{tpu_custom_call.1} parent=5 // pred_fallthru
        _
      %p191 = scmp.lt.s32.totalorder %s14, 2
      // Predicated region
      $region29: #{tpu_custom_call.1} parent=5 // pred_check
        %p192 = pneg %p191
      $region30: #{tpu_custom_call.1} parent=5 // pred_check_branch
        %194 = sbr.rel (%p192) target = $region32
      $region31: #{tpu_custom_call.1} parent=5 // pred_region
        // Predicated region
        $region33: #{tpu_custom_call.1} parent=31 // pred_check
          %p195 = pneg %p48
        $region34: #{tpu_custom_call.1} parent=31 // pred_check_branch
          %197 = sbr.rel (%p195) target = $region36
        $region35: #{tpu_custom_call.1} parent=31 // pred_region
          %s198 = sadd.s32 %s21, %s22
          %s199 = smul.u32 52, %s198
          %p200 = scmp.lt.s32.totalorder %s199, 103
          %s201 = scalar_select %p200, %s199, 103
          %s202 = smul.addr %s201, 4
          %s203 = scalar_lea.vmem %s0, %s202
          %s204 = sadd.s32 %s21, %s22
          %s205 = smul.u32 52, %s204
        $region36: #{tpu_custom_call.1} parent=31 // pred_fallthru
          _
      $region32: #{tpu_custom_call.1} parent=5 // pred_fallthru
        _
      %p206 = scmp.le.s32.totalorder 1, %s14
      %p207 = scmp.lt.s32.totalorder %s14, 3
      %p208 = pnand %p206, %p207
      %p209 = pneg %p208
      // Predicated region
      $region37: #{tpu_custom_call.1} parent=5 // pred_check
        _
      $region38: #{tpu_custom_call.1} parent=5 // pred_check_branch
        %211 = sbr.rel (%p208) target = $region40
      $region39: #{tpu_custom_call.1} parent=5 // pred_region
        %s212 = ssub.s32 %s14, 1
        %s213 = sadd.s32 %s23, %s24
        %s214 = smul.u32 52, %s213
        %p215 = scmp.lt.s32.totalorder %s214, 103
        %s216 = scalar_select %p215, %s214, 103
        %s217 = smul.addr %s216, 4
        %s218 = scalar_lea.vmem %s0, %s217
        %p219 = pneg %p54
        %p220 = pneg %p51
        %p221 = pneg %p75
        %p222 = pneg %p72
        %p223 = pneg %p96
        %p224 = pneg %p93
        %p225 = pneg %p117
        %p226 = pneg %p114
        %p227 = pneg %p138
        %p228 = pneg %p135
        %p229 = pneg %p164
        %p230 = pneg %p161
        %s231 = sand.u32 %s151, 1
        %s232 = scalar_lea.sflag [#allocation3], %s231
        %s233 = sand.u32 %s151, 1
        %s234 = smul.addr %s233, 2
        %s235 = scalar_lea.vmem [#allocation2], %s234
        %s236 = sadd.s32 %s23, %s24
        %s237 = smul.u32 52, %s236
        %p238 = scmp.lt.s32.totalorder %s237, 103
        %s239 = scalar_select %p238, %s237, 103
        %s240 = smul.addr %s239, 4
        %s241 = scalar_lea.vmem %s0, %s240
        %s242 = sadd.s32 %s23, %s24
        %s243 = smul.u32 52, %s242
        %v245 = vld [vmem:[%s241] sm:$0xf]
        %v246 = vld [vmem:[%s241 + $0x4] sm:$0xf]
        %v247 = vld [vmem:[%s241 + $0x8] sm:$0xf]
        %v248 = vld [vmem:[%s241 + $0xc] sm:$0xf]
        %v249 = vld [vmem:[%s241 + $0x10] sm:$0xf]
        %v250 = vld [vmem:[%s241 + $0x14] sm:$0xf]
        %v251 = vld [vmem:[%s241 + $0x18] sm:$0xf]
        %v252 = vld [vmem:[%s241 + $0x1c] sm:$0xf]
        %v253 = vld [vmem:[%s241 + $0x20] sm:$0xf]
        %v254 = vld [vmem:[%s241 + $0x24] sm:$0xf]
        %v255 = vld [vmem:[%s241 + $0x28] sm:$0xf]
        %v256 = vld [vmem:[%s241 + $0x2c] sm:$0xf]
        %v257 = vld [vmem:[%s241 + $0x30] sm:$0xf]
        %v258 = vld [vmem:[%s241 + $0x34] sm:$0xf]
        %v259 = vld [vmem:[%s241 + $0x38] sm:$0xf]
        %v260 = vld [vmem:[%s241 + $0x3c] sm:$0xf]
        %v261 = vld [vmem:[%s241 + $0x40] sm:$0xf]
        %v262 = vld [vmem:[%s241 + $0x44] sm:$0xf]
        %v263 = vld [vmem:[%s241 + $0x48] sm:$0xf]
        %v264 = vld [vmem:[%s241 + $0x4c] sm:$0xf]
        %v265 = vld [vmem:[%s241 + $0x50] sm:$0xf]
        %v266 = vld [vmem:[%s241 + $0x54] sm:$0xf]
        %v267 = vld [vmem:[%s241 + $0x58] sm:$0xf]
        %v268 = vld [vmem:[%s241 + $0x5c] sm:$0xf]
        %v269 = vld [vmem:[%s241 + $0x60] sm:$0xf]
        %v270 = vld [vmem:[%s241 + $0x64] sm:$0xf]
        %v271 = vld [vmem:[%s241 + $0x68] sm:$0xf]
        %v272 = vld [vmem:[%s241 + $0x6c] sm:$0xf]
        %v273 = vld [vmem:[%s241 + $0x70] sm:$0xf]
        %v274 = vld [vmem:[%s241 + $0x74] sm:$0xf]
        %v275 = vld [vmem:[%s241 + $0x78] sm:$0xf]
        %v276 = vld [vmem:[%s241 + $0x7c] sm:$0xf]
        %v277 = vld [vmem:[%s241 + $0x80] sm:$0xf]
        %v278 = vld [vmem:[%s241 + $0x84] sm:$0xf]
        %v279 = vld [vmem:[%s241 + $0x88] sm:$0xf]
        %v280 = vld [vmem:[%s241 + $0x8c] sm:$0xf]
        %v281 = vld [vmem:[%s241 + $0x90] sm:$0xf]
        %v282 = vld [vmem:[%s241 + $0x94] sm:$0xf]
        %v283 = vld [vmem:[%s241 + $0x98] sm:$0xf]
        %v284 = vld [vmem:[%s241 + $0x9c] sm:$0xf]
        %v285 = vld [vmem:[%s241 + $0xa0] sm:$0xf]
        %v286 = vld [vmem:[%s241 + $0xa4] sm:$0xf]
        %v287 = vld [vmem:[%s241 + $0xa8] sm:$0xf]
        %v288 = vld [vmem:[%s241 + $0xac] sm:$0xf]
        %v289 = vld [vmem:[%s241 + $0xb0] sm:$0xf]
        %v290 = vld [vmem:[%s241 + $0xb4] sm:$0xf]
        %v291 = vld [vmem:[%s241 + $0xb8] sm:$0xf]
        %v292 = vld [vmem:[%s241 + $0xbc] sm:$0xf]
        %v293 = vld [vmem:[%s241 + $0xc0] sm:$0xf]
        %v294 = vld [vmem:[%s241 + $0xc4] sm:$0xf]
        %v295 = vld [vmem:[%s241 + $0xc8] sm:$0xf]
        %v296 = vld [vmem:[%s241 + $0xcc] sm:$0xf]
        %v297 = vld [vmem:[%s1] sm:$0xf]
        %v298 = vld [vmem:[%s2] sm:$0x1]
        %v300 = vlaneseq
        %v301 = vshrl.u32 %v300, 7
        %v302 = vsub.s32 0, %v301
        %v303 = vrot.slane %v298, %v302
        %v357 = vunpack.c.l.b16 %v245
        %v358 = vunpack.c.l.b16 %v246
        %v359 = vunpack.c.l.b16 %v247
        %v360 = vunpack.c.l.b16 %v248
        %v361 = vunpack.c.l.b16 %v249
        %v362 = vunpack.c.l.b16 %v250
        %v363 = vunpack.c.l.b16 %v251
        %v364 = vunpack.c.l.b16 %v252
        %v365 = vunpack.c.l.b16 %v253
        %v366 = vunpack.c.l.b16 %v254
        %v367 = vunpack.c.l.b16 %v255
        %v368 = vunpack.c.l.b16 %v256
        %v369 = vunpack.c.l.b16 %v257
        %v370 = vunpack.c.l.b16 %v258
        %v371 = vunpack.c.l.b16 %v259
        %v372 = vunpack.c.l.b16 %v260
        %v373 = vunpack.c.l.b16 %v261
        %v374 = vunpack.c.l.b16 %v262
        %v375 = vunpack.c.l.b16 %v263
        %v376 = vunpack.c.l.b16 %v264
        %v377 = vunpack.c.l.b16 %v265
        %v378 = vunpack.c.l.b16 %v266
        %v379 = vunpack.c.l.b16 %v267
        %v380 = vunpack.c.l.b16 %v268
        %v381 = vunpack.c.l.b16 %v269
        %v382 = vunpack.c.l.b16 %v270
        %v383 = vunpack.c.l.b16 %v271
        %v384 = vunpack.c.l.b16 %v272
        %v385 = vunpack.c.l.b16 %v273
        %v386 = vunpack.c.l.b16 %v274
        %v387 = vunpack.c.l.b16 %v275
        %v388 = vunpack.c.l.b16 %v276
        %v389 = vunpack.c.l.b16 %v277
        %v390 = vunpack.c.l.b16 %v278
        %v391 = vunpack.c.l.b16 %v279
        %v392 = vunpack.c.l.b16 %v280
        %v393 = vunpack.c.l.b16 %v281
        %v394 = vunpack.c.l.b16 %v282
        %v395 = vunpack.c.l.b16 %v283
        %v396 = vunpack.c.l.b16 %v284
        %v397 = vunpack.c.l.b16 %v285
        %v398 = vunpack.c.l.b16 %v286
        %v399 = vunpack.c.l.b16 %v287
        %v400 = vunpack.c.l.b16 %v288
        %v401 = vunpack.c.l.b16 %v289
        %v402 = vunpack.c.l.b16 %v290
        %v403 = vunpack.c.l.b16 %v291
        %v404 = vunpack.c.l.b16 %v292
        %v405 = vunpack.c.l.b16 %v293
        %v406 = vunpack.c.l.b16 %v294
        %v407 = vunpack.c.l.b16 %v295
        %v408 = vunpack.c.l.b16 %v296
        %v409 = vpack.c.b16 %v358, %v357
        %v410 = vpack.c.b16 %v360, %v359
        %v411 = vpack.c.b16 %v362, %v361
        %v412 = vpack.c.b16 %v364, %v363
        %v413 = vpack.c.b16 %v366, %v365
        %v414 = vpack.c.b16 %v368, %v367
        %v415 = vpack.c.b16 %v370, %v369
        %v416 = vpack.c.b16 %v372, %v371
        %v417 = vpack.c.b16 %v374, %v373
        %v418 = vpack.c.b16 %v376, %v375
        %v419 = vpack.c.b16 %v378, %v377
        %v420 = vpack.c.b16 %v380, %v379
        %v421 = vpack.c.b16 %v382, %v381
        %v422 = vpack.c.b16 %v384, %v383
        %v423 = vpack.c.b16 %v386, %v385
        %v424 = vpack.c.b16 %v388, %v387
        %v425 = vpack.c.b16 %v390, %v389
        %v426 = vpack.c.b16 %v392, %v391
        %v427 = vpack.c.b16 %v394, %v393
        %v428 = vpack.c.b16 %v396, %v395
        %v429 = vpack.c.b16 %v398, %v397
        %v430 = vpack.c.b16 %v400, %v399
        %v431 = vpack.c.b16 %v402, %v401
        %v432 = vpack.c.b16 %v404, %v403
        %v433 = vpack.c.b16 %v406, %v405
        %v434 = vpack.c.b16 %v408, %v407
        %vm435 = vcmask 64512
        %v437 = vsel %vm435, %v409, 0
        %v440 = vsel %vm435, %v410, 0
        %v443 = vsel %vm435, %v411, 0
        %v446 = vsel %vm435, %v412, 0
        %v449 = vsel %vm435, %v413, 0
        %v452 = vsel %vm435, %v414, 0
        %v455 = vsel %vm435, %v415, 0
        %v458 = vsel %vm435, %v416, 0
        %v461 = vsel %vm435, %v417, 0
        %v464 = vsel %vm435, %v418, 0
        %v467 = vsel %vm435, %v419, 0
        %v470 = vsel %vm435, %v420, 0
        %v473 = vsel %vm435, %v421, 0
        %v476 = vsel %vm435, %v422, 0
        %v479 = vsel %vm435, %v423, 0
        %v482 = vsel %vm435, %v424, 0
        %v485 = vsel %vm435, %v425, 0
        %v488 = vsel %vm435, %v426, 0
        %v491 = vsel %vm435, %v427, 0
        %v494 = vsel %vm435, %v428, 0
        %v497 = vsel %vm435, %v429, 0
        %v500 = vsel %vm435, %v430, 0
        %v503 = vsel %vm435, %v431, 0
        %v506 = vsel %vm435, %v432, 0
        %v509 = vsel %vm435, %v433, 0
        %v512 = vsel %vm435, %v434, 0
        %vm514 = vcmask 1043456
        %v516 = vsel %vm514, %v297, 0
        %518 = vmatprep.subr.bf16.mxu0 0
        %519 = vmatpush1.bf16.msra.mxu0 %v516
        %520 = vmatprep.subr.bf16.mxu0 0
        %521 = vmatpush1.bf16.msra.mxu0 0
        %522 = vmatprep.subr.bf16.mxu0 0
        %523 = vmatpush1.bf16.msra.mxu0 0
        %524 = vmatprep.subr.bf16.mxu0 0
        %525 = vmatpush1.bf16.msra.mxu0 0
        %526 = vmatprep.subr.bf16.mxu0 0
        %527 = vmatpush1.bf16.msra.mxu0 0
        %528 = vmatprep.subr.bf16.mxu0 0
        %529 = vmatpush1.bf16.msra.mxu0 0
        %530 = vmatprep.subr.bf16.mxu0 0
        %531 = vmatpush1.bf16.msra.mxu0 0
        %532 = vmatprep.subr.bf16.mxu0 0
        %533 = vmatpush1.bf16.msra.mxu0 0
        %534 = vmatprep.subr.bf16.mxu0 0
        %535 = vmatpush1.bf16.msra.mxu0 0
        %536 = vmatprep.subr.bf16.mxu0 0
        %537 = vmatpush1.bf16.msra.mxu0 0
        %538 = vmatprep.subr.bf16.mxu0 0
        %539 = vmatpush1.bf16.msra.mxu0 0
        %540 = vmatprep.subr.bf16.mxu0 0
        %541 = vmatpush1.bf16.msra.mxu0 0
        %542 = vmatprep.subr.bf16.mxu0 0
        %543 = vmatpush1.bf16.msra.mxu0 0
        %544 = vmatprep.subr.bf16.mxu0 0
        %545 = vmatpush1.bf16.msra.mxu0 0
        %546 = vmatprep.subr.bf16.mxu0 0
        %547 = vmatpush1.bf16.msra.mxu0 0
        %548 = vmatprep.subr.bf16.mxu0 0
        %549 = vmatpush1.bf16.msra.mxu0 0
        %550 = vmatprep.mubr.bf16.mxu0 0
        %551 = vmatmul.mubr.bf16.gmra.mrb[0].mxu0 %v437
        %v552 = vpop.f32.mrb[0].mxu0
        %v553 = vadd.f32 %v303, %v552
        %v554 = vpop.f32.mrb[0].mxu0
        %v555 = vpop.f32.mrb[0].mxu0
        %v556 = vadd.f32 %v303, %v555
        %v557 = vpop.f32.mrb[0].mxu0
        %558 = vmatprep.mubr.bf16.mxu0 0
        %559 = vmatmul.mubr.bf16.gmra.mrb[0].mxu0 %v440
        %v560 = vpop.f32.mrb[0].mxu0
        %v561 = vadd.f32 %v303, %v560
        %v562 = vpop.f32.mrb[0].mxu0
        %v563 = vpop.f32.mrb[0].mxu0
        %v564 = vadd.f32 %v303, %v563
        %v565 = vpop.f32.mrb[0].mxu0
        %566 = vmatprep.mubr.bf16.mxu0 0
        %567 = vmatmul.mubr.bf16.gmra.mrb[0].mxu0 %v443
        %v568 = vpop.f32.mrb[0].mxu0
        %v569 = vadd.f32 %v303, %v568
        %v570 = vpop.f32.mrb[0].mxu0
        %v571 = vpop.f32.mrb[0].mxu0
        %v572 = vadd.f32 %v303, %v571
        %v573 = vpop.f32.mrb[0].mxu0
        %574 = vmatprep.mubr.bf16.mxu0 0
        %575 = vmatmul.mubr.bf16.gmra.mrb[0].mxu0 %v446
        %v576 = vpop.f32.mrb[0].mxu0
        %v577 = vadd.f32 %v303, %v576
        %v578 = vpop.f32.mrb[0].mxu0
        %v579 = vpop.f32.mrb[0].mxu0
        %v580 = vadd.f32 %v303, %v579
        %v581 = vpop.f32.mrb[0].mxu0
        %582 = vmatprep.mubr.bf16.mxu0 0
        %583 = vmatmul.mubr.bf16.gmra.mrb[0].mxu0 %v449
        %v584 = vpop.f32.mrb[0].mxu0
        %v585 = vadd.f32 %v303, %v584
        %v586 = vpop.f32.mrb[0].mxu0
        %v587 = vpop.f32.mrb[0].mxu0
        %v588 = vadd.f32 %v303, %v587
        %v589 = vpop.f32.mrb[0].mxu0
        %590 = vmatprep.mubr.bf16.mxu0 0
        %591 = vmatmul.mubr.bf16.gmra.mrb[0].mxu0 %v452
        %v592 = vpop.f32.mrb[0].mxu0
        %v593 = vadd.f32 %v303, %v592
        %v594 = vpop.f32.mrb[0].mxu0
        %v595 = vpop.f32.mrb[0].mxu0
        %v596 = vadd.f32 %v303, %v595
        %v597 = vpop.f32.mrb[0].mxu0
        %598 = vmatprep.mubr.bf16.mxu0 0
        %599 = vmatmul.mubr.bf16.gmra.mrb[0].mxu0 %v455
        %v600 = vpop.f32.mrb[0].mxu0
        %v601 = vadd.f32 %v303, %v600
        %v602 = vpop.f32.mrb[0].mxu0
        %v603 = vpop.f32.mrb[0].mxu0
        %v604 = vadd.f32 %v303, %v603
        %v605 = vpop.f32.mrb[0].mxu0
        %606 = vmatprep.mubr.bf16.mxu0 0
        %607 = vmatmul.mubr.bf16.gmra.mrb[0].mxu0 %v458
        %v608 = vpop.f32.mrb[0].mxu0
        %v609 = vadd.f32 %v303, %v608
        %v610 = vpop.f32.mrb[0].mxu0
        %v611 = vpop.f32.mrb[0].mxu0
        %v612 = vadd.f32 %v303, %v611
        %v613 = vpop.f32.mrb[0].mxu0
        %614 = vmatprep.mubr.bf16.mxu0 0
        %615 = vmatmul.mubr.bf16.gmra.mrb[0].mxu0 %v461
        %v616 = vpop.f32.mrb[0].mxu0
        %v617 = vadd.f32 %v303, %v616
        %v618 = vpop.f32.mrb[0].mxu0
        %v619 = vpop.f32.mrb[0].mxu0
        %v620 = vadd.f32 %v303, %v619
        %v621 = vpop.f32.mrb[0].mxu0
        %622 = vmatprep.mubr.bf16.mxu0 0
        %623 = vmatmul.mubr.bf16.gmra.mrb[0].mxu0 %v464
        %v624 = vpop.f32.mrb[0].mxu0
        %v625 = vadd.f32 %v303, %v624
        %v626 = vpop.f32.mrb[0].mxu0
        %v627 = vpop.f32.mrb[0].mxu0
        %v628 = vadd.f32 %v303, %v627
        %v629 = vpop.f32.mrb[0].mxu0
        %630 = vmatprep.mubr.bf16.mxu0 0
        %631 = vmatmul.mubr.bf16.gmra.mrb[0].mxu0 %v467
        %v632 = vpop.f32.mrb[0].mxu0
        %v633 = vadd.f32 %v303, %v632
        %v634 = vpop.f32.mrb[0].mxu0
        %v635 = vpop.f32.mrb[0].mxu0
        %v636 = vadd.f32 %v303, %v635
        %v637 = vpop.f32.mrb[0].mxu0
        %638 = vmatprep.mubr.bf16.mxu0 0
        %639 = vmatmul.mubr.bf16.gmra.mrb[0].mxu0 %v470
        %v640 = vpop.f32.mrb[0].mxu0
        %v641 = vadd.f32 %v303, %v640
        %v642 = vpop.f32.mrb[0].mxu0
        %v643 = vpop.f32.mrb[0].mxu0
        %v644 = vadd.f32 %v303, %v643
        %v645 = vpop.f32.mrb[0].mxu0
        %646 = vmatprep.mubr.bf16.mxu0 0
        %647 = vmatmul.mubr.bf16.gmra.mrb[0].mxu0 %v473
        %v648 = vpop.f32.mrb[0].mxu0
        %v649 = vadd.f32 %v303, %v648
        %v650 = vpop.f32.mrb[0].mxu0
        %v651 = vpop.f32.mrb[0].mxu0
        %v652 = vadd.f32 %v303, %v651
        %v653 = vpop.f32.mrb[0].mxu0
        %654 = vmatprep.mubr.bf16.mxu0 0
        %655 = vmatmul.mubr.bf16.gmra.mrb[0].mxu0 %v476
        %v656 = vpop.f32.mrb[0].mxu0
        %v657 = vadd.f32 %v303, %v656
        %v658 = vpop.f32.mrb[0].mxu0
        %v659 = vpop.f32.mrb[0].mxu0
        %v660 = vadd.f32 %v303, %v659
        %v661 = vpop.f32.mrb[0].mxu0
        %662 = vmatprep.mubr.bf16.mxu0 0
        %663 = vmatmul.mubr.bf16.gmra.mrb[0].mxu0 %v479
        %v664 = vpop.f32.mrb[0].mxu0
        %v665 = vadd.f32 %v303, %v664
        %v666 = vpop.f32.mrb[0].mxu0
        %v667 = vpop.f32.mrb[0].mxu0
        %v668 = vadd.f32 %v303, %v667
        %v669 = vpop.f32.mrb[0].mxu0
        %670 = vmatprep.mubr.bf16.mxu0 0
        %671 = vmatmul.mubr.bf16.gmra.mrb[0].mxu0 %v482
        %v672 = vpop.f32.mrb[0].mxu0
        %v673 = vadd.f32 %v303, %v672
        %v674 = vpop.f32.mrb[0].mxu0
        %v675 = vpop.f32.mrb[0].mxu0
        %v676 = vadd.f32 %v303, %v675
        %v677 = vpop.f32.mrb[0].mxu0
        %678 = vmatprep.mubr.bf16.mxu0 0
        %679 = vmatmul.mubr.bf16.gmra.mrb[0].mxu0 %v485
        %v680 = vpop.f32.mrb[0].mxu0
        %v681 = vadd.f32 %v303, %v680
        %v682 = vpop.f32.mrb[0].mxu0
        %v683 = vpop.f32.mrb[0].mxu0
        %v684 = vadd.f32 %v303, %v683
        %v685 = vpop.f32.mrb[0].mxu0
        %686 = vmatprep.mubr.bf16.mxu0 0
        %687 = vmatmul.mubr.bf16.gmra.mrb[0].mxu0 %v488
        %v688 = vpop.f32.mrb[0].mxu0
        %v689 = vadd.f32 %v303, %v688
        %v690 = vpop.f32.mrb[0].mxu0
        %v691 = vpop.f32.mrb[0].mxu0
        %v692 = vadd.f32 %v303, %v691
        %v693 = vpop.f32.mrb[0].mxu0
        %694 = vmatprep.mubr.bf16.mxu0 0
        %695 = vmatmul.mubr.bf16.gmra.mrb[0].mxu0 %v491
        %v696 = vpop.f32.mrb[0].mxu0
        %v697 = vadd.f32 %v303, %v696
        %v698 = vpop.f32.mrb[0].mxu0
        %v699 = vpop.f32.mrb[0].mxu0
        %v700 = vadd.f32 %v303, %v699
        %v701 = vpop.f32.mrb[0].mxu0
        %702 = vmatprep.mubr.bf16.mxu0 0
        %703 = vmatmul.mubr.bf16.gmra.mrb[0].mxu0 %v494
        %v704 = vpop.f32.mrb[0].mxu0
        %v705 = vadd.f32 %v303, %v704
        %v706 = vpop.f32.mrb[0].mxu0
        %v707 = vpop.f32.mrb[0].mxu0
        %v708 = vadd.f32 %v303, %v707
        %v709 = vpop.f32.mrb[0].mxu0
        %710 = vmatprep.mubr.bf16.mxu0 0
        %711 = vmatmul.mubr.bf16.gmra.mrb[0].mxu0 %v497
        %v712 = vpop.f32.mrb[0].mxu0
        %v713 = vadd.f32 %v303, %v712
        %v714 = vpop.f32.mrb[0].mxu0
        %v715 = vpop.f32.mrb[0].mxu0
        %v716 = vadd.f32 %v303, %v715
        %v717 = vpop.f32.mrb[0].mxu0
        %718 = vmatprep.mubr.bf16.mxu0 0
        %719 = vmatmul.mubr.bf16.gmra.mrb[0].mxu0 %v500
        %v720 = vpop.f32.mrb[0].mxu0
        %v721 = vadd.f32 %v303, %v720
        %v722 = vpop.f32.mrb[0].mxu0
        %v723 = vpop.f32.mrb[0].mxu0
        %v724 = vadd.f32 %v303, %v723
        %v725 = vpop.f32.mrb[0].mxu0
        %726 = vmatprep.mubr.bf16.mxu0 0
        %727 = vmatmul.mubr.bf16.gmra.mrb[0].mxu0 %v503
        %v728 = vpop.f32.mrb[0].mxu0
        %v729 = vadd.f32 %v303, %v728
        %v730 = vpop.f32.mrb[0].mxu0
        %v731 = vpop.f32.mrb[0].mxu0
        %v732 = vadd.f32 %v303, %v731
        %v733 = vpop.f32.mrb[0].mxu0
        %734 = vmatprep.mubr.bf16.mxu0 0
        %735 = vmatmul.mubr.bf16.gmra.mrb[0].mxu0 %v506
        %v736 = vpop.f32.mrb[0].mxu0
        %v737 = vadd.f32 %v303, %v736
        %v738 = vpop.f32.mrb[0].mxu0
        %v739 = vpop.f32.mrb[0].mxu0
        %v740 = vadd.f32 %v303, %v739
        %v741 = vpop.f32.mrb[0].mxu0
        %742 = vmatprep.mubr.bf16.mxu0 0
        %743 = vmatmul.mubr.bf16.gmra.mrb[0].mxu0 %v509
        %v744 = vpop.f32.mrb[0].mxu0
        %v745 = vadd.f32 %v303, %v744
        %v746 = vpop.f32.mrb[0].mxu0
        %v747 = vpop.f32.mrb[0].mxu0
        %v748 = vadd.f32 %v303, %v747
        %v749 = vpop.f32.mrb[0].mxu0
        %750 = vmatprep.mubr.bf16.mxu0 0
        %751 = vmatmul.mubr.bf16.gmra.mrb[0].mxu0 %v512
        %v752 = vpop.f32.mrb[0].mxu0
        %v753 = vadd.f32 %v303, %v752
        %v754 = vpop.f32.mrb[0].mxu0
        %v755 = vpop.f32.mrb[0].mxu0
        %v756 = vadd.f32 %v303, %v755
        %v757 = vpop.f32.mrb[0].mxu0
        %758 = vdwg.mxu0
        %v759 = vmax.f32 %v553, 0.0
        %v760 = vmax.f32 %v556, 0.0
        %v761 = vmax.f32 %v561, 0.0
        %v762 = vmax.f32 %v564, 0.0
        %v763 = vmax.f32 %v569, 0.0
        %v764 = vmax.f32 %v572, 0.0
        %v765 = vmax.f32 %v577, 0.0
        %v766 = vmax.f32 %v580, 0.0
        %v767 = vmax.f32 %v585, 0.0
        %v768 = vmax.f32 %v588, 0.0
        %v769 = vmax.f32 %v593, 0.0
        %v770 = vmax.f32 %v596, 0.0
        %v771 = vmax.f32 %v601, 0.0
        %v772 = vmax.f32 %v604, 0.0
        %v773 = vmax.f32 %v609, 0.0
        %v774 = vmax.f32 %v612, 0.0
        %v775 = vmax.f32 %v617, 0.0
        %v776 = vmax.f32 %v620, 0.0
        %v777 = vmax.f32 %v625, 0.0
        %v778 = vmax.f32 %v628, 0.0
        %v779 = vmax.f32 %v633, 0.0
        %v780 = vmax.f32 %v636, 0.0
        %v781 = vmax.f32 %v641, 0.0
        %v782 = vmax.f32 %v644, 0.0
        %v783 = vmax.f32 %v649, 0.0
        %v784 = vmax.f32 %v652, 0.0
        %v785 = vmax.f32 %v657, 0.0
        %v786 = vmax.f32 %v660, 0.0
        %v787 = vmax.f32 %v665, 0.0
        %v788 = vmax.f32 %v668, 0.0
        %v789 = vmax.f32 %v673, 0.0
        %v790 = vmax.f32 %v676, 0.0
        %v791 = vmax.f32 %v681, 0.0
        %v792 = vmax.f32 %v684, 0.0
        %v793 = vmax.f32 %v689, 0.0
        %v794 = vmax.f32 %v692, 0.0
        %v795 = vmax.f32 %v697, 0.0
        %v796 = vmax.f32 %v700, 0.0
        %v797 = vmax.f32 %v705, 0.0
        %v798 = vmax.f32 %v708, 0.0
        %v799 = vmax.f32 %v713, 0.0
        %v800 = vmax.f32 %v716, 0.0
        %v801 = vmax.f32 %v721, 0.0
        %v802 = vmax.f32 %v724, 0.0
        %v803 = vmax.f32 %v729, 0.0
        %v804 = vmax.f32 %v732, 0.0
        %v805 = vmax.f32 %v737, 0.0
        %v806 = vmax.f32 %v740, 0.0
        %v807 = vmax.f32 %v745, 0.0
        %v808 = vmax.f32 %v748, 0.0
        %v809 = vmax.f32 %v753, 0.0
        %v810 = vmax.f32 %v756, 0.0
        %v811 = vpack.c.bf16 %v760, %v759
        %v812 = vpack.c.bf16 %v762, %v761
        %v813 = vpack.c.bf16 %v764, %v763
        %v814 = vpack.c.bf16 %v766, %v765
        %v815 = vpack.c.bf16 %v768, %v767
        %v816 = vpack.c.bf16 %v770, %v769
        %v817 = vpack.c.bf16 %v772, %v771
        %v818 = vpack.c.bf16 %v774, %v773
        %v819 = vpack.c.bf16 %v776, %v775
        %v820 = vpack.c.bf16 %v778, %v777
        %v821 = vpack.c.bf16 %v780, %v779
        %v822 = vpack.c.bf16 %v782, %v781
        %v823 = vpack.c.bf16 %v784, %v783
        %v824 = vpack.c.bf16 %v786, %v785
        %v825 = vpack.c.bf16 %v788, %v787
        %v826 = vpack.c.bf16 %v790, %v789
        %v827 = vpack.c.bf16 %v792, %v791
        %v828 = vpack.c.bf16 %v794, %v793
        %v829 = vpack.c.bf16 %v796, %v795
        %v830 = vpack.c.bf16 %v798, %v797
        %v831 = vpack.c.bf16 %v800, %v799
        %v832 = vpack.c.bf16 %v802, %v801
        %v833 = vpack.c.bf16 %v804, %v803
        %v834 = vpack.c.bf16 %v806, %v805
        %v835 = vpack.c.bf16 %v808, %v807
        %v836 = vpack.c.bf16 %v810, %v809
        %v837 = vld [vmem:[%s3] sm:$0xf]
        %v838 = vld [vmem:[%s3 + $0x4] sm:$0xf]
        %v839 = vld [vmem:[%s3 + $0x8] sm:$0xf]
        %v840 = vld [vmem:[%s3 + $0xc] sm:$0xf]
        %v841 = vld [vmem:[%s3 + $0x10] sm:$0xf]
        %v842 = vld [vmem:[%s3 + $0x14] sm:$0xf]
        %v843 = vld [vmem:[%s3 + $0x18] sm:$0xf]
        %v844 = vld [vmem:[%s3 + $0x1c] sm:$0xf]
        %v845 = vld [vmem:[%s3 + $0x20] sm:$0xf]
        %v846 = vld [vmem:[%s3 + $0x24] sm:$0xf]
        %v847 = vld [vmem:[%s3 + $0x28] sm:$0xf]
        %v848 = vld [vmem:[%s3 + $0x2c] sm:$0xf]
        %v849 = vld [vmem:[%s3 + $0x30] sm:$0xf]
        %v850 = vld [vmem:[%s3 + $0x34] sm:$0xf]
        %v851 = vld [vmem:[%s3 + $0x38] sm:$0xf]
        %v852 = vld [vmem:[%s3 + $0x3c] sm:$0xf]
        %v853 = vld [vmem:[%s4] sm:$0x1]
        %v855 = vlaneseq
        %v856 = vshrl.u32 %v855, 7
        %v857 = vsub.s32 0, %v856
        %v858 = vrot.slane %v853, %v857
        %v876 = vunpack.c.l.b16 %v837
        %v877 = vunpack.c.l.b16 %v838
        %v878 = vunpack.c.l.b16 %v839
        %v879 = vunpack.c.l.b16 %v840
        %v880 = vunpack.c.l.b16 %v841
        %v881 = vunpack.c.l.b16 %v842
        %v882 = vunpack.c.l.b16 %v843
        %v883 = vunpack.c.l.b16 %v844
        %v884 = vunpack.c.l.b16 %v845
        %v885 = vunpack.c.l.b16 %v846
        %v886 = vunpack.c.l.b16 %v847
        %v887 = vunpack.c.l.b16 %v848
        %v888 = vunpack.c.l.b16 %v849
        %v889 = vunpack.c.l.b16 %v850
        %v890 = vunpack.c.l.b16 %v851
        %v891 = vunpack.c.l.b16 %v852
        %v892 = vpack.c.b16 %v877, %v876
        %v893 = vpack.c.b16 %v879, %v878
        %v894 = vpack.c.b16 %v881, %v880
        %v895 = vpack.c.b16 %v883, %v882
        %v896 = vpack.c.b16 %v885, %v884
        %v897 = vpack.c.b16 %v887, %v886
        %v898 = vpack.c.b16 %v889, %v888
        %v899 = vpack.c.b16 %v891, %v890
        %908 = vmatprep.subr.bf16.mxu0 0
        %909 = vmatpush1.bf16.msra.mxu0 %v892
        %910 = vmatprep.subr.bf16.mxu0 0
        %911 = vmatpush1.bf16.msra.mxu0 %v893
        %912 = vmatprep.subr.bf16.mxu0 0
        %913 = vmatpush1.bf16.msra.mxu0 %v894
        %914 = vmatprep.subr.bf16.mxu0 0
        %915 = vmatpush1.bf16.msra.mxu0 %v895
        %916 = vmatprep.subr.bf16.mxu0 0
        %917 = vmatpush1.bf16.msra.mxu0 %v896
        %918 = vmatprep.subr.bf16.mxu0 0
        %919 = vmatpush1.bf16.msra.mxu0 %v897
        %920 = vmatprep.subr.bf16.mxu0 0
        %921 = vmatpush1.bf16.msra.mxu0 %v898
        %922 = vmatprep.subr.bf16.mxu0 0
        %923 = vmatpush1.bf16.msra.mxu0 %v899
        %924 = vmatprep.subr.bf16.mxu0 0
        %925 = vmatpush1.bf16.msra.mxu0 0
        %926 = vmatprep.subr.bf16.mxu0 0
        %927 = vmatpush1.bf16.msra.mxu0 0
        %928 = vmatprep.subr.bf16.mxu0 0
        %929 = vmatpush1.bf16.msra.mxu0 0
        %930 = vmatprep.subr.bf16.mxu0 0
        %931 = vmatpush1.bf16.msra.mxu0 0
        %932 = vmatprep.subr.bf16.mxu0 0
        %933 = vmatpush1.bf16.msra.mxu0 0
        %934 = vmatprep.subr.bf16.mxu0 0
        %935 = vmatpush1.bf16.msra.mxu0 0
        %936 = vmatprep.subr.bf16.mxu0 0
        %937 = vmatpush1.bf16.msra.mxu0 0
        %938 = vmatprep.subr.bf16.mxu0 0
        %939 = vmatpush1.bf16.msra.mxu0 0
        %940 = vmatprep.mubr.bf16.mxu0 0
        %941 = vmatmul.mubr.bf16.gmra.mrb[0].mxu0 %v811
        %v942 = vpop.f32.mrb[0].mxu0
        %v943 = vadd.f32 %v858, %v942
        %v944 = vpop.f32.mrb[0].mxu0
        %v945 = vpop.f32.mrb[0].mxu0
        %v946 = vadd.f32 %v858, %v945
        %v947 = vpop.f32.mrb[0].mxu0
        %948 = vmatprep.mubr.bf16.mxu0 0
        %949 = vmatmul.mubr.bf16.gmra.mrb[0].mxu0 %v812
        %v950 = vpop.f32.mrb[0].mxu0
        %v951 = vadd.f32 %v858, %v950
        %v952 = vpop.f32.mrb[0].mxu0
        %v953 = vpop.f32.mrb[0].mxu0
        %v954 = vadd.f32 %v858, %v953
        %v955 = vpop.f32.mrb[0].mxu0
        %956 = vmatprep.mubr.bf16.mxu0 0
        %957 = vmatmul.mubr.bf16.gmra.mrb[0].mxu0 %v813
        %v958 = vpop.f32.mrb[0].mxu0
        %v959 = vadd.f32 %v858, %v958
        %v960 = vpop.f32.mrb[0].mxu0
        %v961 = vpop.f32.mrb[0].mxu0
        %v962 = vadd.f32 %v858, %v961
        %v963 = vpop.f32.mrb[0].mxu0
        %964 = vmatprep.mubr.bf16.mxu0 0
        %965 = vmatmul.mubr.bf16.gmra.mrb[0].mxu0 %v814
        %v966 = vpop.f32.mrb[0].mxu0
        %v967 = vadd.f32 %v858, %v966
        %v968 = vpop.f32.mrb[0].mxu0
        %v969 = vpop.f32.mrb[0].mxu0
        %v970 = vadd.f32 %v858, %v969
        %v971 = vpop.f32.mrb[0].mxu0
        %972 = vmatprep.mubr.bf16.mxu0 0
        %973 = vmatmul.mubr.bf16.gmra.mrb[0].mxu0 %v815
        %v974 = vpop.f32.mrb[0].mxu0
        %v975 = vadd.f32 %v858, %v974
        %v976 = vpop.f32.mrb[0].mxu0
        %v977 = vpop.f32.mrb[0].mxu0
        %v978 = vadd.f32 %v858, %v977
        %v979 = vpop.f32.mrb[0].mxu0
        %980 = vmatprep.mubr.bf16.mxu0 0
        %981 = vmatmul.mubr.bf16.gmra.mrb[0].mxu0 %v816
        %v982 = vpop.f32.mrb[0].mxu0
        %v983 = vadd.f32 %v858, %v982
        %v984 = vpop.f32.mrb[0].mxu0
        %v985 = vpop.f32.mrb[0].mxu0
        %v986 = vadd.f32 %v858, %v985
        %v987 = vpop.f32.mrb[0].mxu0
        %988 = vmatprep.mubr.bf16.mxu0 0
        %989 = vmatmul.mubr.bf16.gmra.mrb[0].mxu0 %v817
        %v990 = vpop.f32.mrb[0].mxu0
        %v991 = vadd.f32 %v858, %v990
        %v992 = vpop.f32.mrb[0].mxu0
        %v993 = vpop.f32.mrb[0].mxu0
        %v994 = vadd.f32 %v858, %v993
        %v995 = vpop.f32.mrb[0].mxu0
        %996 = vmatprep.mubr.bf16.mxu0 0
        %997 = vmatmul.mubr.bf16.gmra.mrb[0].mxu0 %v818
        %v998 = vpop.f32.mrb[0].mxu0
        %v999 = vadd.f32 %v858, %v998
        %v1000 = vpop.f32.mrb[0].mxu0
        %v1001 = vpop.f32.mrb[0].mxu0
        %v1002 = vadd.f32 %v858, %v1001
        %v1003 = vpop.f32.mrb[0].mxu0
        %1004 = vmatprep.mubr.bf16.mxu0 0
        %1005 = vmatmul.mubr.bf16.gmra.mrb[0].mxu0 %v819
        %v1006 = vpop.f32.mrb[0].mxu0
        %v1007 = vadd.f32 %v858, %v1006
        %v1008 = vpop.f32.mrb[0].mxu0
        %v1009 = vpop.f32.mrb[0].mxu0
        %v1010 = vadd.f32 %v858, %v1009
        %v1011 = vpop.f32.mrb[0].mxu0
        %1012 = vmatprep.mubr.bf16.mxu0 0
        %1013 = vmatmul.mubr.bf16.gmra.mrb[0].mxu0 %v820
        %v1014 = vpop.f32.mrb[0].mxu0
        %v1015 = vadd.f32 %v858, %v1014
        %v1016 = vpop.f32.mrb[0].mxu0
        %v1017 = vpop.f32.mrb[0].mxu0
        %v1018 = vadd.f32 %v858, %v1017
        %v1019 = vpop.f32.mrb[0].mxu0
        %1020 = vmatprep.mubr.bf16.mxu0 0
        %1021 = vmatmul.mubr.bf16.gmra.mrb[0].mxu0 %v821
        %v1022 = vpop.f32.mrb[0].mxu0
        %v1023 = vadd.f32 %v858, %v1022
        %v1024 = vpop.f32.mrb[0].mxu0
        %v1025 = vpop.f32.mrb[0].mxu0
        %v1026 = vadd.f32 %v858, %v1025
        %v1027 = vpop.f32.mrb[0].mxu0
        %1028 = vmatprep.mubr.bf16.mxu0 0
        %1029 = vmatmul.mubr.bf16.gmra.mrb[0].mxu0 %v822
        %v1030 = vpop.f32.mrb[0].mxu0
        %v1031 = vadd.f32 %v858, %v1030
        %v1032 = vpop.f32.mrb[0].mxu0
        %v1033 = vpop.f32.mrb[0].mxu0
        %v1034 = vadd.f32 %v858, %v1033
        %v1035 = vpop.f32.mrb[0].mxu0
        %1036 = vmatprep.mubr.bf16.mxu0 0
        %1037 = vmatmul.mubr.bf16.gmra.mrb[0].mxu0 %v823
        %v1038 = vpop.f32.mrb[0].mxu0
        %v1039 = vadd.f32 %v858, %v1038
        %v1040 = vpop.f32.mrb[0].mxu0
        %v1041 = vpop.f32.mrb[0].mxu0
        %v1042 = vadd.f32 %v858, %v1041
        %v1043 = vpop.f32.mrb[0].mxu0
        %1044 = vmatprep.mubr.bf16.mxu0 0
        %1045 = vmatmul.mubr.bf16.gmra.mrb[0].mxu0 %v824
        %v1046 = vpop.f32.mrb[0].mxu0
        %v1047 = vadd.f32 %v858, %v1046
        %v1048 = vpop.f32.mrb[0].mxu0
        %v1049 = vpop.f32.mrb[0].mxu0
        %v1050 = vadd.f32 %v858, %v1049
        %v1051 = vpop.f32.mrb[0].mxu0
        %1052 = vmatprep.mubr.bf16.mxu0 0
        %1053 = vmatmul.mubr.bf16.gmra.mrb[0].mxu0 %v825
        %v1054 = vpop.f32.mrb[0].mxu0
        %v1055 = vadd.f32 %v858, %v1054
        %v1056 = vpop.f32.mrb[0].mxu0
        %v1057 = vpop.f32.mrb[0].mxu0
        %v1058 = vadd.f32 %v858, %v1057
        %v1059 = vpop.f32.mrb[0].mxu0
        %1060 = vmatprep.mubr.bf16.mxu0 0
        %1061 = vmatmul.mubr.bf16.gmra.mrb[0].mxu0 %v826
        %v1062 = vpop.f32.mrb[0].mxu0
        %v1063 = vadd.f32 %v858, %v1062
        %v1064 = vpop.f32.mrb[0].mxu0
        %v1065 = vpop.f32.mrb[0].mxu0
        %v1066 = vadd.f32 %v858, %v1065
        %v1067 = vpop.f32.mrb[0].mxu0
        %1068 = vmatprep.mubr.bf16.mxu0 0
        %1069 = vmatmul.mubr.bf16.gmra.mrb[0].mxu0 %v827
        %v1070 = vpop.f32.mrb[0].mxu0
        %v1071 = vadd.f32 %v858, %v1070
        %v1072 = vpop.f32.mrb[0].mxu0
        %v1073 = vpop.f32.mrb[0].mxu0
        %v1074 = vadd.f32 %v858, %v1073
        %v1075 = vpop.f32.mrb[0].mxu0
        %1076 = vmatprep.mubr.bf16.mxu0 0
        %1077 = vmatmul.mubr.bf16.gmra.mrb[0].mxu0 %v828
        %v1078 = vpop.f32.mrb[0].mxu0
        %v1079 = vadd.f32 %v858, %v1078
        %v1080 = vpop.f32.mrb[0].mxu0
        %v1081 = vpop.f32.mrb[0].mxu0
        %v1082 = vadd.f32 %v858, %v1081
        %v1083 = vpop.f32.mrb[0].mxu0
        %1084 = vmatprep.mubr.bf16.mxu0 0
        %1085 = vmatmul.mubr.bf16.gmra.mrb[0].mxu0 %v829
        %v1086 = vpop.f32.mrb[0].mxu0
        %v1087 = vadd.f32 %v858, %v1086
        %v1088 = vpop.f32.mrb[0].mxu0
        %v1089 = vpop.f32.mrb[0].mxu0
        %v1090 = vadd.f32 %v858, %v1089
        %v1091 = vpop.f32.mrb[0].mxu0
        %1092 = vmatprep.mubr.bf16.mxu0 0
        %1093 = vmatmul.mubr.bf16.gmra.mrb[0].mxu0 %v830
        %v1094 = vpop.f32.mrb[0].mxu0
        %v1095 = vadd.f32 %v858, %v1094
        %v1096 = vpop.f32.mrb[0].mxu0
        %v1097 = vpop.f32.mrb[0].mxu0
        %v1098 = vadd.f32 %v858, %v1097
        %v1099 = vpop.f32.mrb[0].mxu0
        %1100 = vmatprep.mubr.bf16.mxu0 0
        %1101 = vmatmul.mubr.bf16.gmra.mrb[0].mxu0 %v831
        %v1102 = vpop.f32.mrb[0].mxu0
        %v1103 = vadd.f32 %v858, %v1102
        %v1104 = vpop.f32.mrb[0].mxu0
        %v1105 = vpop.f32.mrb[0].mxu0
        %v1106 = vadd.f32 %v858, %v1105
        %v1107 = vpop.f32.mrb[0].mxu0
        %1108 = vmatprep.mubr.bf16.mxu0 0
        %1109 = vmatmul.mubr.bf16.gmra.mrb[0].mxu0 %v832
        %v1110 = vpop.f32.mrb[0].mxu0
        %v1111 = vadd.f32 %v858, %v1110
        %v1112 = vpop.f32.mrb[0].mxu0
        %v1113 = vpop.f32.mrb[0].mxu0
        %v1114 = vadd.f32 %v858, %v1113
        %v1115 = vpop.f32.mrb[0].mxu0
        %1116 = vmatprep.mubr.bf16.mxu0 0
        %1117 = vmatmul.mubr.bf16.gmra.mrb[0].mxu0 %v833
        %v1118 = vpop.f32.mrb[0].mxu0
        %v1119 = vadd.f32 %v858, %v1118
        %v1120 = vpop.f32.mrb[0].mxu0
        %v1121 = vpop.f32.mrb[0].mxu0
        %v1122 = vadd.f32 %v858, %v1121
        %v1123 = vpop.f32.mrb[0].mxu0
        %1124 = vmatprep.mubr.bf16.mxu0 0
        %1125 = vmatmul.mubr.bf16.gmra.mrb[0].mxu0 %v834
        %v1126 = vpop.f32.mrb[0].mxu0
        %v1127 = vadd.f32 %v858, %v1126
        %v1128 = vpop.f32.mrb[0].mxu0
        %v1129 = vpop.f32.mrb[0].mxu0
        %v1130 = vadd.f32 %v858, %v1129
        %v1131 = vpop.f32.mrb[0].mxu0
        %1132 = vmatprep.mubr.bf16.mxu0 0
        %1133 = vmatmul.mubr.bf16.gmra.mrb[0].mxu0 %v835
        %v1134 = vpop.f32.mrb[0].mxu0
        %v1135 = vadd.f32 %v858, %v1134
        %v1136 = vpop.f32.mrb[0].mxu0
        %v1137 = vpop.f32.mrb[0].mxu0
        %v1138 = vadd.f32 %v858, %v1137
        %v1139 = vpop.f32.mrb[0].mxu0
        %1140 = vmatprep.mubr.bf16.mxu0 0
        %1141 = vmatmul.mubr.bf16.gmra.mrb[0].mxu0 %v836
        %v1142 = vpop.f32.mrb[0].mxu0
        %v1143 = vadd.f32 %v858, %v1142
        %v1144 = vpop.f32.mrb[0].mxu0
        %v1145 = vpop.f32.mrb[0].mxu0
        %v1146 = vadd.f32 %v858, %v1145
        %v1147 = vpop.f32.mrb[0].mxu0
        %1148 = vdwg.mxu0
        %v1149 = vmax.f32 %v943, 0.0
        %v1150 = vmax.f32 %v946, 0.0
        %v1151 = vmax.f32 %v951, 0.0
        %v1152 = vmax.f32 %v954, 0.0
        %v1153 = vmax.f32 %v959, 0.0
        %v1154 = vmax.f32 %v962, 0.0
        %v1155 = vmax.f32 %v967, 0.0
        %v1156 = vmax.f32 %v970, 0.0
        %v1157 = vmax.f32 %v975, 0.0
        %v1158 = vmax.f32 %v978, 0.0
        %v1159 = vmax.f32 %v983, 0.0
        %v1160 = vmax.f32 %v986, 0.0
        %v1161 = vmax.f32 %v991, 0.0
        %v1162 = vmax.f32 %v994, 0.0
        %v1163 = vmax.f32 %v999, 0.0
        %v1164 = vmax.f32 %v1002, 0.0
        %v1165 = vmax.f32 %v1007, 0.0
        %v1166 = vmax.f32 %v1010, 0.0
        %v1167 = vmax.f32 %v1015, 0.0
        %v1168 = vmax.f32 %v1018, 0.0
        %v1169 = vmax.f32 %v1023, 0.0
        %v1170 = vmax.f32 %v1026, 0.0
        %v1171 = vmax.f32 %v1031, 0.0
        %v1172 = vmax.f32 %v1034, 0.0
        %v1173 = vmax.f32 %v1039, 0.0
        %v1174 = vmax.f32 %v1042, 0.0
        %v1175 = vmax.f32 %v1047, 0.0
        %v1176 = vmax.f32 %v1050, 0.0
        %v1177 = vmax.f32 %v1055, 0.0
        %v1178 = vmax.f32 %v1058, 0.0
        %v1179 = vmax.f32 %v1063, 0.0
        %v1180 = vmax.f32 %v1066, 0.0
        %v1181 = vmax.f32 %v1071, 0.0
        %v1182 = vmax.f32 %v1074, 0.0
        %v1183 = vmax.f32 %v1079, 0.0
        %v1184 = vmax.f32 %v1082, 0.0
        %v1185 = vmax.f32 %v1087, 0.0
        %v1186 = vmax.f32 %v1090, 0.0
        %v1187 = vmax.f32 %v1095, 0.0
        %v1188 = vmax.f32 %v1098, 0.0
        %v1189 = vmax.f32 %v1103, 0.0
        %v1190 = vmax.f32 %v1106, 0.0
        %v1191 = vmax.f32 %v1111, 0.0
        %v1192 = vmax.f32 %v1114, 0.0
        %v1193 = vmax.f32 %v1119, 0.0
        %v1194 = vmax.f32 %v1122, 0.0
        %v1195 = vmax.f32 %v1127, 0.0
        %v1196 = vmax.f32 %v1130, 0.0
        %v1197 = vmax.f32 %v1135, 0.0
        %v1198 = vmax.f32 %v1138, 0.0
        %v1199 = vmax.f32 %v1143, 0.0
        %v1200 = vmax.f32 %v1146, 0.0
        %v1201 = vlaneseq
        %v1202 = vshrl.u32 %v1201, 7
        %v1203 = vadd.s32 %v1202, 8
        %v1204 = vadd.s32 %v1202, 16
        %v1205 = vadd.s32 %v1202, 24
        %v1206 = vadd.s32 %v1202, 32
        %v1207 = vadd.s32 %v1202, 40
        %v1208 = vadd.s32 %v1202, 48
        %v1209 = vadd.s32 %v1202, 56
        %v1210 = vadd.s32 %v1202, 64
        %v1211 = vadd.s32 %v1202, 72
        %v1212 = vadd.s32 %v1202, 80
        %v1213 = vadd.s32 %v1202, 88
        %v1214 = vadd.s32 %v1202, 96
        %v1215 = vadd.s32 %v1202, 104
        %v1216 = vadd.s32 %v1202, 112
        %v1217 = vadd.s32 %v1202, 120
        %v1218 = vadd.s32 %v1202, 128
        %v1219 = vadd.s32 %v1202, 136
        %v1220 = vadd.s32 %v1202, 144
        %v1221 = vadd.s32 %v1202, 152
        %v1222 = vadd.s32 %v1202, 160
        %v1223 = vadd.s32 %v1202, 168
        %v1224 = vadd.s32 %v1202, 176
        %v1225 = vadd.s32 %v1202, 184
        %v1226 = vadd.s32 %v1202, 192
        %v1227 = vadd.s32 %v1202, 200
        %vm1228 = vcmp.lt.s32.totalorder %v1202, 200
        %vm1229 = vcmp.lt.s32.totalorder %v1203, 200
        %vm1230 = vcmp.lt.s32.totalorder %v1204, 200
        %vm1231 = vcmp.lt.s32.totalorder %v1205, 200
        %vm1232 = vcmp.lt.s32.totalorder %v1206, 200
        %vm1233 = vcmp.lt.s32.totalorder %v1207, 200
        %vm1234 = vcmp.lt.s32.totalorder %v1208, 200
        %vm1235 = vcmp.lt.s32.totalorder %v1209, 200
        %vm1236 = vcmp.lt.s32.totalorder %v1210, 200
        %vm1237 = vcmp.lt.s32.totalorder %v1211, 200
        %vm1238 = vcmp.lt.s32.totalorder %v1212, 200
        %vm1239 = vcmp.lt.s32.totalorder %v1213, 200
        %vm1240 = vcmp.lt.s32.totalorder %v1214, 200
        %vm1241 = vcmp.lt.s32.totalorder %v1215, 200
        %vm1242 = vcmp.lt.s32.totalorder %v1216, 200
        %vm1243 = vcmp.lt.s32.totalorder %v1217, 200
        %vm1244 = vcmp.lt.s32.totalorder %v1218, 200
        %vm1245 = vcmp.lt.s32.totalorder %v1219, 200
        %vm1246 = vcmp.lt.s32.totalorder %v1220, 200
        %vm1247 = vcmp.lt.s32.totalorder %v1221, 200
        %vm1248 = vcmp.lt.s32.totalorder %v1222, 200
        %vm1249 = vcmp.lt.s32.totalorder %v1223, 200
        %vm1250 = vcmp.lt.s32.totalorder %v1224, 200
        %vm1251 = vcmp.lt.s32.totalorder %v1225, 200
        %vm1252 = vcmp.lt.s32.totalorder %v1226, 200
        %vm1253 = vcmp.lt.s32.totalorder %v1227, 200
        %v1254 = vsel %vm1228, 1, 0
        %v1255 = vsel %vm1229, 1, 0
        %v1256 = vsel %vm1230, 1, 0
        %v1257 = vsel %vm1231, 1, 0
        %v1258 = vsel %vm1232, 1, 0
        %v1259 = vsel %vm1233, 1, 0
        %v1260 = vsel %vm1234, 1, 0
        %v1261 = vsel %vm1235, 1, 0
        %v1262 = vsel %vm1236, 1, 0
        %v1263 = vsel %vm1237, 1, 0
        %v1264 = vsel %vm1238, 1, 0
        %v1265 = vsel %vm1239, 1, 0
        %v1266 = vsel %vm1240, 1, 0
        %v1267 = vsel %vm1241, 1, 0
        %v1268 = vsel %vm1242, 1, 0
        %v1269 = vsel %vm1243, 1, 0
        %v1270 = vsel %vm1244, 1, 0
        %v1271 = vsel %vm1245, 1, 0
        %v1272 = vsel %vm1246, 1, 0
        %v1273 = vsel %vm1247, 1, 0
        %v1274 = vsel %vm1248, 1, 0
        %v1275 = vsel %vm1249, 1, 0
        %v1276 = vsel %vm1250, 1, 0
        %v1277 = vsel %vm1251, 1, 0
        %v1278 = vsel %vm1252, 1, 0
        %v1279 = vsel %vm1253, 1, 0
        %vm1280 = vcmp.eq.s32.totalorder %v1254, 1
        %vm1281 = vcmp.eq.s32.totalorder %v1255, 1
        %vm1282 = vcmp.eq.s32.totalorder %v1256, 1
        %vm1283 = vcmp.eq.s32.totalorder %v1257, 1
        %vm1284 = vcmp.eq.s32.totalorder %v1258, 1
        %vm1285 = vcmp.eq.s32.totalorder %v1259, 1
        %vm1286 = vcmp.eq.s32.totalorder %v1260, 1
        %vm1287 = vcmp.eq.s32.totalorder %v1261, 1
        %vm1288 = vcmp.eq.s32.totalorder %v1262, 1
        %vm1289 = vcmp.eq.s32.totalorder %v1263, 1
        %vm1290 = vcmp.eq.s32.totalorder %v1264, 1
        %vm1291 = vcmp.eq.s32.totalorder %v1265, 1
        %vm1292 = vcmp.eq.s32.totalorder %v1266, 1
        %vm1293 = vcmp.eq.s32.totalorder %v1267, 1
        %vm1294 = vcmp.eq.s32.totalorder %v1268, 1
        %vm1295 = vcmp.eq.s32.totalorder %v1269, 1
        %vm1296 = vcmp.eq.s32.totalorder %v1270, 1
        %vm1297 = vcmp.eq.s32.totalorder %v1271, 1
        %vm1298 = vcmp.eq.s32.totalorder %v1272, 1
        %vm1299 = vcmp.eq.s32.totalorder %v1273, 1
        %vm1300 = vcmp.eq.s32.totalorder %v1274, 1
        %vm1301 = vcmp.eq.s32.totalorder %v1275, 1
        %vm1302 = vcmp.eq.s32.totalorder %v1276, 1
        %vm1303 = vcmp.eq.s32.totalorder %v1277, 1
        %vm1304 = vcmp.eq.s32.totalorder %v1278, 1
        %vm1305 = vcmp.eq.s32.totalorder %v1279, 1
        %v1306 = vsel %vm1280, %v1149, -inf
        %v1307 = vsel %vm1281, %v1150, -inf
        %v1308 = vsel %vm1282, %v1151, -inf
        %v1309 = vsel %vm1283, %v1152, -inf
        %v1310 = vsel %vm1284, %v1153, -inf
        %v1311 = vsel %vm1285, %v1154, -inf
        %v1312 = vsel %vm1286, %v1155, -inf
        %v1313 = vsel %vm1287, %v1156, -inf
        %v1314 = vsel %vm1288, %v1157, -inf
        %v1315 = vsel %vm1289, %v1158, -inf
        %v1316 = vsel %vm1290, %v1159, -inf
        %v1317 = vsel %vm1291, %v1160, -inf
        %v1318 = vsel %vm1292, %v1161, -inf
        %v1319 = vsel %vm1293, %v1162, -inf
        %v1320 = vsel %vm1294, %v1163, -inf
        %v1321 = vsel %vm1295, %v1164, -inf
        %v1322 = vsel %vm1296, %v1165, -inf
        %v1323 = vsel %vm1297, %v1166, -inf
        %v1324 = vsel %vm1298, %v1167, -inf
        %v1325 = vsel %vm1299, %v1168, -inf
        %v1326 = vsel %vm1300, %v1169, -inf
        %v1327 = vsel %vm1301, %v1170, -inf
        %v1328 = vsel %vm1302, %v1171, -inf
        %v1329 = vsel %vm1303, %v1172, -inf
        %v1330 = vsel %vm1304, %v1173, -inf
        %v1331 = vsel %vm1305, %v1174, -inf
        %v1332 = vmax.f32 %v1306, %v1310
        %v1333 = vmax.f32 %v1307, %v1311
        %v1334 = vmax.f32 %v1308, %v1312
        %v1335 = vmax.f32 %v1309, %v1313
        %v1336 = vmax.f32 %v1332, %v1314
        %v1337 = vmax.f32 %v1333, %v1315
        %v1338 = vmax.f32 %v1334, %v1316
        %v1339 = vmax.f32 %v1335, %v1317
        %v1340 = vmax.f32 %v1336, %v1318
        %v1341 = vmax.f32 %v1337, %v1319
        %v1342 = vmax.f32 %v1338, %v1320
        %v1343 = vmax.f32 %v1339, %v1321
        %v1344 = vmax.f32 %v1340, %v1322
        %v1345 = vmax.f32 %v1341, %v1323
        %v1346 = vmax.f32 %v1342, %v1324
        %v1347 = vmax.f32 %v1343, %v1325
        %v1348 = vmax.f32 %v1344, %v1326
        %v1349 = vmax.f32 %v1345, %v1327
        %v1350 = vmax.f32 %v1346, %v1328
        %v1351 = vmax.f32 %v1347, %v1329
        %v1352 = vmax.f32 %v1348, %v1330
        %v1353 = vmax.f32 %v1349, %v1331
        %v1354 = vmax.f32 %v1352, %v1353
        %v1355 = vmax.f32 %v1350, %v1351
        %v1356 = vmax.f32 %v1354, %v1355
        %v1357 = vrot.slane %v1356, 4
        %v1358 = vmax.f32 %v1356, %v1357
        %v1359 = vrot.slane %v1358, 2
        %v1360 = vmax.f32 %v1358, %v1359
        %v1361 = vrot.slane %v1360, 1
        %v1362 = vmax.f32 %v1360, %v1361
        %v1363 = vsel %vm1280, %v1175, -inf
        %v1364 = vsel %vm1281, %v1176, -inf
        %v1365 = vsel %vm1282, %v1177, -inf
        %v1366 = vsel %vm1283, %v1178, -inf
        %v1367 = vsel %vm1284, %v1179, -inf
        %v1368 = vsel %vm1285, %v1180, -inf
        %v1369 = vsel %vm1286, %v1181, -inf
        %v1370 = vsel %vm1287, %v1182, -inf
        %v1371 = vsel %vm1288, %v1183, -inf
        %v1372 = vsel %vm1289, %v1184, -inf
        %v1373 = vsel %vm1290, %v1185, -inf
        %v1374 = vsel %vm1291, %v1186, -inf
        %v1375 = vsel %vm1292, %v1187, -inf
        %v1376 = vsel %vm1293, %v1188, -inf
        %v1377 = vsel %vm1294, %v1189, -inf
        %v1378 = vsel %vm1295, %v1190, -inf
        %v1379 = vsel %vm1296, %v1191, -inf
        %v1380 = vsel %vm1297, %v1192, -inf
        %v1381 = vsel %vm1298, %v1193, -inf
        %v1382 = vsel %vm1299, %v1194, -inf
        %v1383 = vsel %vm1300, %v1195, -inf
        %v1384 = vsel %vm1301, %v1196, -inf
        %v1385 = vsel %vm1302, %v1197, -inf
        %v1386 = vsel %vm1303, %v1198, -inf
        %v1387 = vsel %vm1304, %v1199, -inf
        %v1388 = vsel %vm1305, %v1200, -inf
        %v1389 = vmax.f32 %v1363, %v1367
        %v1390 = vmax.f32 %v1364, %v1368
        %v1391 = vmax.f32 %v1365, %v1369
        %v1392 = vmax.f32 %v1366, %v1370
        %v1393 = vmax.f32 %v1389, %v1371
        %v1394 = vmax.f32 %v1390, %v1372
        %v1395 = vmax.f32 %v1391, %v1373
        %v1396 = vmax.f32 %v1392, %v1374
        %v1397 = vmax.f32 %v1393, %v1375
        %v1398 = vmax.f32 %v1394, %v1376
        %v1399 = vmax.f32 %v1395, %v1377
        %v1400 = vmax.f32 %v1396, %v1378
        %v1401 = vmax.f32 %v1397, %v1379
        %v1402 = vmax.f32 %v1398, %v1380
        %v1403 = vmax.f32 %v1399, %v1381
        %v1404 = vmax.f32 %v1400, %v1382
        %v1405 = vmax.f32 %v1401, %v1383
        %v1406 = vmax.f32 %v1402, %v1384
        %v1407 = vmax.f32 %v1403, %v1385
        %v1408 = vmax.f32 %v1404, %v1386
        %v1409 = vmax.f32 %v1405, %v1387
        %v1410 = vmax.f32 %v1406, %v1388
        %v1411 = vmax.f32 %v1409, %v1410
        %v1412 = vmax.f32 %v1407, %v1408
        %v1413 = vmax.f32 %v1411, %v1412
        %v1414 = vrot.slane %v1413, 4
        %v1415 = vmax.f32 %v1413, %v1414
        %v1416 = vrot.slane %v1415, 2
        %v1417 = vmax.f32 %v1415, %v1416
        %v1418 = vrot.slane %v1417, 1
        %v1419 = vmax.f32 %v1417, %v1418
        %vm1420 = vcmask 1040384
        %v1421 = vsel %vm1420, %v1362, %v1419
        %1422 = vst [vmem:[%s235] sm:$0x3] %v1421
        %s1423 = sand.u32 %s151, 1
        %s1424 = scalar_lea.sflag [#allocation3], %s1423
        %s1425 = sand.u32 %s151, 1
        %s1426 = smul.addr %s1425, 2
        %s1427 = scalar_lea.vmem [#allocation2], %s1426
        // Predicated region
        $region41: #{tpu_custom_call.1} parent=39 // pred_check
          %p1428 = pneg %p161
        $region42: #{tpu_custom_call.1} parent=39 // pred_check_branch
          %1430 = sbr.rel (%p1428) target = $region44
        $region43: #{tpu_custom_call.1} parent=39 // pred_region
          %s1432 = ssub.s32 32, 32
          %1433 = vsyncadd %s1424, %s1432
          %s1434 = smul.addr %s23, 32
          %s1435 = scalar_lea.hbm %s5, %s1434
          %s1437 = sshll.u32 %s1427, 4
          %s1438 = int_to_ptr.vmem [resolvable:$true] %s1437
          %1440 = dma.vmem_to_hbm [thread:$0]  %s1438, 32, %s1435, %s1424
        $region44: #{tpu_custom_call.1} parent=39 // pred_fallthru
          _
      $region40: #{tpu_custom_call.1} parent=5 // pred_fallthru
        _
      %p1441 = scmp.le.s32.totalorder 2, %s14
      // Predicated region
      $region45: #{tpu_custom_call.1} parent=5 // pred_check
        %p1442 = pneg %p1441
      $region46: #{tpu_custom_call.1} parent=5 // pred_check_branch
        %1444 = sbr.rel (%p1442) target = $region48
      $region47: #{tpu_custom_call.1} parent=5 // pred_region
        %s1445 = ssub.s32 %s14, 2
        // Predicated region
        $region49: #{tpu_custom_call.1} parent=47 // pred_check
          %p1446 = pneg %p167
        $region50: #{tpu_custom_call.1} parent=47 // pred_check_branch
          %1448 = sbr.rel (%p1446) target = $region52
        $region51: #{tpu_custom_call.1} parent=47 // pred_region
          %s1449 = sand.u32 %s152, 1
          %s1450 = scalar_lea.sflag [#allocation3], %s1449
          %s1451 = sand.u32 %s152, 1
          %s1452 = smul.addr %s1451, 2
          %s1453 = scalar_lea.vmem [#allocation2], %s1452
          %1454 = dma.done %s1450, 32
        $region52: #{tpu_custom_call.1} parent=47 // pred_fallthru
          _
      $region48: #{tpu_custom_call.1} parent=5 // pred_fallthru
        _
    $region6: #{tpu_custom_call.1} parent=1 // loop_footer
      %s18 = sadd.s32 1, %s14
    $region7: #{tpu_custom_call.1} parent=1 // loop_footer_branch
      %13 = sbr.rel target = $region3
    $region8: #{tpu_custom_call.1} parent=1 // loop_exit
      _
    %1455 = vsyncpa [#allocation3], 1
    %s1456 = scalar_lea.sflag [#allocation3], 1
    %1457 = vsyncpa %s1456, 1

</llo_original>
